<compile_context>
chip_gen: v7x
topology: tpu7x:2x2x1
jax: 0.10.0
libtpu: 0.0.40
codegen_flags: <defaults>
</compile_context>

<pallas_src>
import math
import functools

import jax
import jax.numpy as jnp
import numpy as np
from jax.experimental import pallas as pl
from jax.experimental.pallas import tpu as pltpu


def _mha_kernel(q_ref, k_ref, v_ref, wq_ref, wk_ref, wv_ref, wo_ref,
                gamma_ref, beta_ref, out_ref, attn_ref,
                qp_all, kp_all, vp_all,
                *, b_blk, len_q, len_k, d_k, d_v, n_head,
                compute_dtype, approx_recip):
    h = pl.program_id(1)
    rows_q = b_blk * len_q

    # ---- once per batch block (h == 0): LayerNorm, full-width projections,
    #      residual seed for the output accumulator ----
    @pl.when(h == 0)
    def _project_and_seed():
        q2 = q_ref[...]                                        # (Rq, D) f32
        mean = jnp.mean(q2, axis=-1, keepdims=True)
        cen = q2 - mean
        var = jnp.mean(cen * cen, axis=-1, keepdims=True)
        qn = cen * jax.lax.rsqrt(var + 1e-6) * gamma_ref[...] + beta_ref[...]

        qn_c = qn.astype(compute_dtype)
        k_c = k_ref[...].astype(compute_dtype)
        v_c = v_ref[...].astype(compute_dtype)

        # Lane-dense projections for ALL heads at once (1/sqrt(d_k) is
        # pre-folded into Wq in the wrapper).
        qp = jnp.dot(qn_c, wq_ref[...], preferred_element_type=jnp.float32)  # (Rq, H*dk)
        kp = jnp.dot(k_c, wk_ref[...], preferred_element_type=jnp.float32)   # (Rk, H*dk)
        vp = jnp.dot(v_c, wv_ref[...], preferred_element_type=jnp.float32)   # (Rk, H*dv)

        # Stage per-head slices once so per-head steps only do cheap
        # leading-dim loads (no dynamic lane slicing later).
        for hh in range(n_head):
            qp_all[hh] = (qp[:, hh * d_k:(hh + 1) * d_k]
                          .reshape(b_blk, len_q, d_k).astype(compute_dtype))
            kp_all[hh] = (kp[:, hh * d_k:(hh + 1) * d_k]
                          .reshape(b_blk, len_k, d_k).astype(compute_dtype))
            vp_all[hh] = (vp[:, hh * d_v:(hh + 1) * d_v]
                          .reshape(b_blk, len_k, d_v).astype(compute_dtype))

        out_ref[...] = q2          # residual seeds the resident output block

    # ---- per-head scaled dot-product attention ----
    qh = qp_all[h]                                             # (b, Lq, dk)
    kh = kp_all[h]                                             # (b, Lk, dk)
    vh = vp_all[h]                                             # (b, Lk, dv)

    s = jnp.einsum("bqd,bkd->bqk", qh, kh,
                   preferred_element_type=jnp.float32)         # (b, Lq, Lk)
    m = jnp.max(s, axis=-1, keepdims=True)
    p = jnp.exp(s - m)
    denom = jnp.sum(p, axis=-1, keepdims=True)
    a = p * pl.reciprocal(denom, approx=approx_recip)

    attn_ref[...] = a.reshape(b_blk, 1, len_q, len_k).astype(attn_ref.dtype)

    o = jnp.einsum("bqk,bkd->bqd", a.astype(compute_dtype), vh,
                   preferred_element_type=jnp.float32)         # (b, Lq, dv)

    # ---- output projection, accumulated per head directly into out_ref
    #      (mathematically identical to concat(heads) @ Wo) ----
    out_ref[...] += jnp.dot(o.reshape(rows_q, d_v).astype(compute_dtype),
                            wo_ref[h], preferred_element_type=jnp.float32)


def multi_head_attention(q, k, v, params, *, n_head, d_k, d_v, precision="fast"):
    """q,k,v: (B, L, d_model) float32.  params: PyTorch-layout weights.

    precision="fast":    bf16 MXU matmuls (f32 accumulate), bf16 attn output,
                         approximate softmax reciprocal.
    precision="highest": f32 end-to-end (matches the 1e-4 reference check).
    """
    assert precision in ("fast", "highest")
    B, Lq, D = q.shape
    Lk = k.shape[1]
    Lv = v.shape[1]
    assert Lk == Lv, "k and v must share sequence length"
    assert k.shape[2] == D and v.shape[2] == D

    if precision == "fast":
        compute_dtype, attn_dtype, approx_recip = jnp.bfloat16, jnp.bfloat16, True
    else:
        compute_dtype, attn_dtype, approx_recip = jnp.float32, jnp.float32, False

    # PyTorch nn.Linear stores (out_features, in_features) and computes x @ W^T.
    # Pre-transpose, fold the 1/sqrt(d_k) scale into Wq, cast to compute dtype.
    scale = 1.0 / math.sqrt(d_k)
    wq = (params["w_qs"].T * scale).astype(compute_dtype)            # (D, H*dk)
    wk = params["w_ks"].T.astype(compute_dtype)                      # (D, H*dk)
    wv = params["w_vs"].T.astype(compute_dtype)                      # (D, H*dv)
    wo = params["fc"].T.reshape(n_head, d_v, D).astype(compute_dtype)  # (H, dv, D)
    gamma = params["ln_gamma"].reshape(1, D).astype(jnp.float32)
    beta = params["ln_beta"].reshape(1, D).astype(jnp.float32)

    # Wrapper-side reshape to 2D row slabs is free (XLA metadata only) and
    # removes the in-kernel reshape of the big projection operands.
    q2 = q.reshape(B * Lq, D).astype(jnp.float32)
    k2 = k.reshape(B * Lk, D).astype(jnp.float32)
    v2 = v.reshape(B * Lv, D).astype(jnp.float32)

    in_bytes = 4
    cmp_bytes = jnp.dtype(compute_dtype).itemsize
    attn_bytes = jnp.dtype(attn_dtype).itemsize

    # ---- VMEM-aware batch-block selection (keeps v7x's 64 MiB/TC safe) ----
    try:
        vmem_cap = int(getattr(pltpu.get_tpu_info(), "vmem_capacity_bytes",
                               64 * 1024 * 1024))
    except Exception:  # info query unavailable: assume the smallest (v7x per-TC)
        vmem_cap = 64 * 1024 * 1024
    budget = min(int(vmem_cap * 0.40), 48 * 1024 * 1024)

    w_bytes = ((wq.size + wk.size + wv.size + wo.size) * cmp_bytes
               + (gamma.size + beta.size) * 4)

    def footprint(bb):
        rq, rk = bb * Lq, bb * Lk
        f = 2 * w_bytes                                   # resident weights (2 bufs)
        f += 2 * (rq + 2 * rk) * D * in_bytes             # q/k/v input tiles (2 bufs)
        f += 2 * rq * D * 4                               # out tile, f32 (2 bufs)
        f += 2 * bb * Lq * Lk * attn_bytes                # attn tile (2 bufs)
        f += n_head * (rq * d_k + rk * d_k + rk * d_v) * cmp_bytes  # proj scratch
        return f

    # Largest divisor of B whose footprint fits the budget.  Do NOT shrink to
    # manufacture extra grid steps: the grid is a serial loop on v5e/v6e.
    max_rows = max(512, Lq)
    b_blk = 1
    for cand in range(1, B + 1):
        if B % cand == 0 and cand * Lq <= max_rows and footprint(cand) <= budget:
            b_blk = cand
    nb = B // b_blk
    rows_q = b_blk * Lq
    rows_k = b_blk * Lk

    vmem_limit = int(min(max(32 * 1024 * 1024, footprint(b_blk) + 16 * 1024 * 1024),
                         max(32 * 1024 * 1024, int(vmem_cap * 0.85))))

    kernel = functools.partial(_mha_kernel, b_blk=b_blk, len_q=Lq, len_k=Lk,
                               d_k=d_k, d_v=d_v, n_head=n_head,
                               compute_dtype=compute_dtype,
                               approx_recip=approx_recip)

    grid_spec = pltpu.PrefetchScalarGridSpec(
        num_scalar_prefetch=0,
        grid=(nb, n_head),
        in_specs=[
            pl.BlockSpec((rows_q, D), lambda b, h: (b, 0)),            # q rows
            pl.BlockSpec((rows_k, D), lambda b, h: (b, 0)),            # k rows
            pl.BlockSpec((rows_k, D), lambda b, h: (b, 0)),            # v rows
            pl.BlockSpec((D, n_head * d_k), lambda b, h: (0, 0)),      # Wq (resident)
            pl.BlockSpec((D, n_head * d_k), lambda b, h: (0, 0)),      # Wk (resident)
            pl.BlockSpec((D, n_head * d_v), lambda b, h: (0, 0)),      # Wv (resident)
            pl.BlockSpec((n_head, d_v, D), lambda b, h: (0, 0, 0)),    # Wo (resident)
            pl.BlockSpec((1, D), lambda b, h: (0, 0)),                 # gamma
            pl.BlockSpec((1, D), lambda b, h: (0, 0)),                 # beta
        ],
        out_specs=[
            pl.BlockSpec((rows_q, D), lambda b, h: (b, 0)),            # out (resident over h)
            pl.BlockSpec((b_blk, 1, Lq, Lk), lambda b, h: (b, h, 0, 0)),
        ],
        scratch_shapes=[
            pltpu.VMEM((n_head, b_blk, Lq, d_k), compute_dtype),       # Q per head
            pltpu.VMEM((n_head, b_blk, Lk, d_k), compute_dtype),       # K per head
            pltpu.VMEM((n_head, b_blk, Lk, d_v), compute_dtype),       # V per head
        ],
    )

    flops = 2 * B * (Lq * D * n_head * d_k       # Q projection
                     + Lk * D * n_head * d_k     # K projection
                     + Lk * D * n_head * d_v     # V projection
                     + n_head * Lq * Lk * d_k    # Q @ K^T
                     + n_head * Lq * Lk * d_v    # attn @ V
                     + Lq * n_head * d_v * D)    # output projection
    transcendentals = B * n_head * Lq * Lk + B * Lq
    bytes_accessed = (4 * (q2.size + k2.size + v2.size + B * Lq * D)
                      + cmp_bytes * (wq.size + wk.size + wv.size + wo.size)
                      + 4 * (gamma.size + beta.size)
                      + attn_bytes * B * n_head * Lq * Lk)

    out2, attn = pl.pallas_call(
        kernel,
        out_shape=(
            jax.ShapeDtypeStruct((B * Lq, D), jnp.float32),
            jax.ShapeDtypeStruct((B, n_head, Lq, Lk), attn_dtype),
        ),
        grid_spec=grid_spec,
        compiler_params=pltpu.CompilerParams(
            dimension_semantics=("parallel", "arbitrary"),
            vmem_limit_bytes=vmem_limit,
        ),
        cost_estimate=pl.CostEstimate(flops=flops,
                                      transcendentals=transcendentals,
                                      bytes_accessed=bytes_accessed),
    )(q2, k2, v2, wq, wk, wv, wo, gamma, beta)

    return out2.reshape(B, Lq, D), attn


def _reference(q, k, v, params, *, n_head, d_k, d_v):
    """Pure-JAX reference mirroring the PyTorch forward (eval mode)."""
    B, Lq, D = q.shape
    Lk = k.shape[1]
    residual = q
    mean = jnp.mean(q, axis=-1, keepdims=True)
    var = jnp.mean((q - mean) ** 2, axis=-1, keepdims=True)
    qn = (q - mean) / jnp.sqrt(var + 1e-6) * params["ln_gamma"] + params["ln_beta"]
    Q = (qn @ params["w_qs"].T).reshape(B, Lq, n_head, d_k).transpose(0, 2, 1, 3)
    K = (k @ params["w_ks"].T).reshape(B, Lk, n_head, d_k).transpose(0, 2, 1, 3)
    V = (v @ params["w_vs"].T).reshape(B, Lk, n_head, d_v).transpose(0, 2, 1, 3)
    s = jnp.einsum("bhqd,bhkd->bhqk", Q / math.sqrt(d_k), K)
    a = jax.nn.softmax(s, axis=-1)
    o = jnp.einsum("bhqk,bhkd->bhqd", a, V)
    o = o.transpose(0, 2, 1, 3).reshape(B, Lq, n_head * d_v)
    out = o @ params["fc"].T + residual
    return out, a


if __name__ == "__main__":
    # Small shapes consistent with the module.
    B, L, d_model = 2, 8, 32
    n_head, d_k, d_v = 2, 16, 16

    key = jax.random.PRNGKey(0)
    k_q, k_k, k_v, k_wq, k_wk, k_wv, k_fc = jax.random.split(key, 7)

    q = jax.random.normal(k_q, (B, L, d_model), dtype=jnp.float32)
    k = jax.random.normal(k_k, (B, L, d_model), dtype=jnp.float32)
    v = jax.random.normal(k_v, (B, L, d_model), dtype=jnp.float32)

    params = {
        # PyTorch Linear weights: (out_features, in_features), bias=False.
        "w_qs": 0.05 * jax.random.normal(k_wq, (n_head * d_k, d_model), jnp.float32),
        "w_ks": 0.05 * jax.random.normal(k_wk, (n_head * d_k, d_model), jnp.float32),
        "w_vs": 0.05 * jax.random.normal(k_wv, (n_head * d_v, d_model), jnp.float32),
        "fc":   0.05 * jax.random.normal(k_fc, (d_model, n_head * d_v), jnp.float32),
        # LayerNorm default init: gamma=1, beta=0.
        "ln_gamma": jnp.ones((d_model,), jnp.float32),
        "ln_beta": jnp.zeros((d_model,), jnp.float32),
    }

    ref_out, ref_attn = _reference(q, k, v, params,
                                   n_head=n_head, d_k=d_k, d_v=d_v)

    # Precise path: f32 matmuls, exact reciprocal, f32 attn output.
    out_hi, attn_hi = multi_head_attention(q, k, v, params, n_head=n_head,
                                           d_k=d_k, d_v=d_v, precision="highest")
    out_hi = jax.block_until_ready(out_hi)
    attn_hi = jax.block_until_ready(attn_hi)
    np.testing.assert_allclose(np.asarray(out_hi), np.asarray(ref_out),
                               rtol=1e-4, atol=1e-4)
    np.testing.assert_allclose(np.asarray(attn_hi), np.asarray(ref_attn),
                               rtol=1e-4, atol=1e-4)

    # Fast path: bf16 MXU matmuls (f32 accumulate), bf16 attn writeback,
    # approximate softmax reciprocal.  Looser tolerance by construction.
    out_lo, attn_lo = multi_head_attention(q, k, v, params, n_head=n_head,
                                           d_k=d_k, d_v=d_v, precision="fast")
    out_lo = jax.block_until_ready(out_lo)
    attn_lo = jax.block_until_ready(attn_lo)
    np.testing.assert_allclose(np.asarray(out_lo), np.asarray(ref_out),
                               rtol=3e-2, atol=3e-2)
    np.testing.assert_allclose(np.asarray(attn_lo, dtype=np.float32),
                               np.asarray(ref_attn), rtol=5e-2, atol=2e-2)

    print("KERNEL_OK")
</pallas_src>

<mosaic_0001>
module attributes {stable_mosaic.version = 11 : i64} {
  func.func @_mha_kernel(%arg0: i32, %arg1: i32, %arg2: memref<16x32xf32, #tpu.memory_space<vmem>>, %arg3: memref<16x32xf32, #tpu.memory_space<vmem>>, %arg4: memref<16x32xf32, #tpu.memory_space<vmem>>, %arg5: memref<32x32xf32, #tpu.memory_space<vmem>>, %arg6: memref<32x32xf32, #tpu.memory_space<vmem>>, %arg7: memref<32x32xf32, #tpu.memory_space<vmem>>, %arg8: memref<2x16x32xf32, #tpu.memory_space<vmem>>, %arg9: memref<1x32xf32, #tpu.memory_space<vmem>>, %arg10: memref<1x32xf32, #tpu.memory_space<vmem>>, %arg11: memref<16x32xf32, #tpu.memory_space<vmem>>, %arg12: memref<2x1x8x8xf32, #tpu.memory_space<vmem>>, %arg13: memref<2x2x8x16xf32, #tpu.memory_space<vmem>>, %arg14: memref<2x2x8x16xf32, #tpu.memory_space<vmem>>, %arg15: memref<2x2x8x16xf32, #tpu.memory_space<vmem>>) attributes {dimension_semantics = [#tpu.dimension_semantics<parallel>, #tpu.dimension_semantics<arbitrary>], iteration_bounds = array<i64: 1, 2>, scalar_prefetch = 0 : i64, scratch_operands = 3 : i64, tpu.core_type = #tpu.core_type<tc>, window_params = [{transform_indices = @transform_0, window_bounds = array<i64: 16, 32>}, {transform_indices = @transform_1, window_bounds = array<i64: 16, 32>}, {transform_indices = @transform_2, window_bounds = array<i64: 16, 32>}, {pipeline_mode = #tpu.pipeline_mode<synchronous>, transform_indices = @transform_3, window_bounds = array<i64: 32, 32>}, {pipeline_mode = #tpu.pipeline_mode<synchronous>, transform_indices = @transform_4, window_bounds = array<i64: 32, 32>}, {pipeline_mode = #tpu.pipeline_mode<synchronous>, transform_indices = @transform_5, window_bounds = array<i64: 32, 32>}, {pipeline_mode = #tpu.pipeline_mode<synchronous>, transform_indices = @transform_6, window_bounds = array<i64: 2, 16, 32>}, {pipeline_mode = #tpu.pipeline_mode<synchronous>, transform_indices = @transform_7, window_bounds = array<i64: 1, 32>}, {pipeline_mode = #tpu.pipeline_mode<synchronous>, transform_indices = @transform_8, window_bounds = array<i64: 1, 32>}, {transform_indices = @transform_9, window_bounds = array<i64: 16, 32>}, {transform_indices = @transform_10, window_bounds = array<i64: 2, 1, 8, 8>}]} {
    %c0_i32 = arith.constant 0 : i32
    %0 = arith.cmpi eq, %arg1, %c0_i32 : i32
    %1 = arith.extui %0 : i1 to i32
    %c0_i32_0 = arith.constant 0 : i32
    %2 = arith.cmpi ne, %1, %c0_i32_0 : i32
    scf.if %2 {
      %c0_23 = arith.constant 0 : index
      %c0_24 = arith.constant 0 : index
      %34 = vector.load %arg2[%c0_23, %c0_24] : memref<16x32xf32, #tpu.memory_space<vmem>>, vector<16x32xf32>
      %cst_25 = arith.constant dense<0.000000e+00> : vector<16xf32>
      %35 = vector.multi_reduction <add>, %34, %cst_25 [1] : vector<16x32xf32> to vector<16xf32>
      %36 = vector.shape_cast %35 : vector<16xf32> to vector<16x1xf32>
      %cst_26 = arith.constant 3.200000e+01 : f32
      %37 = vector.broadcast %cst_26 : f32 to vector<16x1xf32>
      %38 = arith.divf %36, %37 : vector<16x1xf32>
      %39 = vector.broadcast %38 : vector<16x1xf32> to vector<16x32xf32>
      %40 = arith.subf %34, %39 : vector<16x32xf32>
      %41 = arith.mulf %40, %40 : vector<16x32xf32>
      %cst_27 = arith.constant dense<0.000000e+00> : vector<16xf32>
      %42 = vector.multi_reduction <add>, %41, %cst_27 [1] : vector<16x32xf32> to vector<16xf32>
      %43 = vector.shape_cast %42 : vector<16xf32> to vector<16x1xf32>
      %cst_28 = arith.constant 3.200000e+01 : f32
      %44 = vector.broadcast %cst_28 : f32 to vector<16x1xf32>
      %45 = arith.divf %43, %44 : vector<16x1xf32>
      %cst_29 = arith.constant 9.99999997E-7 : f32
      %46 = vector.broadcast %cst_29 : f32 to vector<16x1xf32>
      %47 = arith.addf %45, %46 : vector<16x1xf32>
      %48 = math.rsqrt %47 : vector<16x1xf32>
      %49 = vector.broadcast %48 : vector<16x1xf32> to vector<16x32xf32>
      %50 = arith.mulf %40, %49 : vector<16x32xf32>
      %c0_30 = arith.constant 0 : index
      %c0_31 = arith.constant 0 : index
      %51 = vector.load %arg9[%c0_30, %c0_31] : memref<1x32xf32, #tpu.memory_space<vmem>>, vector<1x32xf32>
      %52 = vector.broadcast %51 : vector<1x32xf32> to vector<16x32xf32>
      %53 = arith.mulf %50, %52 : vector<16x32xf32>
      %c0_32 = arith.constant 0 : index
      %c0_33 = arith.constant 0 : index
      %54 = vector.load %arg10[%c0_32, %c0_33] : memref<1x32xf32, #tpu.memory_space<vmem>>, vector<1x32xf32>
      %55 = vector.broadcast %54 : vector<1x32xf32> to vector<16x32xf32>
      %56 = arith.addf %53, %55 : vector<16x32xf32>
      %c0_34 = arith.constant 0 : index
      %c0_35 = arith.constant 0 : index
      %57 = vector.load %arg3[%c0_34, %c0_35] : memref<16x32xf32, #tpu.memory_space<vmem>>, vector<16x32xf32>
      %c0_36 = arith.constant 0 : index
      %c0_37 = arith.constant 0 : index
      %58 = vector.load %arg4[%c0_36, %c0_37] : memref<16x32xf32, #tpu.memory_space<vmem>>, vector<16x32xf32>
      %c0_38 = arith.constant 0 : index
      %c0_39 = arith.constant 0 : index
      %59 = vector.load %arg5[%c0_38, %c0_39] : memref<32x32xf32, #tpu.memory_space<vmem>>, vector<32x32xf32>
      %cst_40 = arith.constant dense<0.000000e+00> : vector<16x32xf32>
      %60 = tpu.matmul %56, %59, %cst_40 {dimension_numbers = #tpu.dot_dimension_numbers<[1], [0], [0], [1], [0, 0, 1, 1], [], []>} : vector<16x32xf32>, vector<32x32xf32>, vector<16x32xf32> -> vector<16x32xf32>
      %c0_41 = arith.constant 0 : index
      %c0_42 = arith.constant 0 : index
      %61 = vector.load %arg6[%c0_41, %c0_42] : memref<32x32xf32, #tpu.memory_space<vmem>>, vector<32x32xf32>
      %cst_43 = arith.constant dense<0.000000e+00> : vector<16x32xf32>
      %62 = tpu.matmul %57, %61, %cst_43 {dimension_numbers = #tpu.dot_dimension_numbers<[1], [0], [0], [1], [0, 0, 1, 1], [], []>} : vector<16x32xf32>, vector<32x32xf32>, vector<16x32xf32> -> vector<16x32xf32>
      %c0_44 = arith.constant 0 : index
      %c0_45 = arith.constant 0 : index
      %63 = vector.load %arg7[%c0_44, %c0_45] : memref<32x32xf32, #tpu.memory_space<vmem>>, vector<32x32xf32>
      %cst_46 = arith.constant dense<0.000000e+00> : vector<16x32xf32>
      %64 = tpu.matmul %58, %63, %cst_46 {dimension_numbers = #tpu.dot_dimension_numbers<[1], [0], [0], [1], [0, 0, 1, 1], [], []>} : vector<16x32xf32>, vector<32x32xf32>, vector<16x32xf32> -> vector<16x32xf32>
      %65 = vector.extract_strided_slice %60 {offsets = [0, 0], sizes = [16, 16], strides = [1, 1]} : vector<16x32xf32> to vector<16x16xf32>
      %66 = vector.shape_cast %65 : vector<16x16xf32> to vector<2x8x16xf32>
      %c0_47 = arith.constant 0 : index
      %c0_48 = arith.constant 0 : index
      %c0_49 = arith.constant 0 : index
      %c0_50 = arith.constant 0 : index
      %67 = vector.load %arg13[%c0_47, %c0_48, %c0_49, %c0_50] : memref<2x2x8x16xf32, #tpu.memory_space<vmem>>, vector<1x2x8x16xf32>
      %68 = vector.shape_cast %67 : vector<1x2x8x16xf32> to vector<2x8x16xf32>
      %69 = vector.shape_cast %66 : vector<2x8x16xf32> to vector<1x2x8x16xf32>
      tpu.vector_store %arg13[%c0_47, %c0_48, %c0_49, %c0_50], %69 {strides = array<i32>} : memref<2x2x8x16xf32, #tpu.memory_space<vmem>>, vector<1x2x8x16xf32>,
      %70 = vector.extract_strided_slice %62 {offsets = [0, 0], sizes = [16, 16], strides = [1, 1]} : vector<16x32xf32> to vector<16x16xf32>
      %71 = vector.shape_cast %70 : vector<16x16xf32> to vector<2x8x16xf32>
      %c0_51 = arith.constant 0 : index
      %c0_52 = arith.constant 0 : index
      %c0_53 = arith.constant 0 : index
      %c0_54 = arith.constant 0 : index
      %72 = vector.load %arg14[%c0_51, %c0_52, %c0_53, %c0_54] : memref<2x2x8x16xf32, #tpu.memory_space<vmem>>, vector<1x2x8x16xf32>
      %73 = vector.shape_cast %72 : vector<1x2x8x16xf32> to vector<2x8x16xf32>
      %74 = vector.shape_cast %71 : vector<2x8x16xf32> to vector<1x2x8x16xf32>
      tpu.vector_store %arg14[%c0_51, %c0_52, %c0_53, %c0_54], %74 {strides = array<i32>} : memref<2x2x8x16xf32, #tpu.memory_space<vmem>>, vector<1x2x8x16xf32>,
      %75 = vector.extract_strided_slice %64 {offsets = [0, 0], sizes = [16, 16], strides = [1, 1]} : vector<16x32xf32> to vector<16x16xf32>
      %76 = vector.shape_cast %75 : vector<16x16xf32> to vector<2x8x16xf32>
      %c0_55 = arith.constant 0 : index
      %c0_56 = arith.constant 0 : index
      %c0_57 = arith.constant 0 : index
      %c0_58 = arith.constant 0 : index
      %77 = vector.load %arg15[%c0_55, %c0_56, %c0_57, %c0_58] : memref<2x2x8x16xf32, #tpu.memory_space<vmem>>, vector<1x2x8x16xf32>
      %78 = vector.shape_cast %77 : vector<1x2x8x16xf32> to vector<2x8x16xf32>
      %79 = vector.shape_cast %76 : vector<2x8x16xf32> to vector<1x2x8x16xf32>
      tpu.vector_store %arg15[%c0_55, %c0_56, %c0_57, %c0_58], %79 {strides = array<i32>} : memref<2x2x8x16xf32, #tpu.memory_space<vmem>>, vector<1x2x8x16xf32>,
      %80 = vector.extract_strided_slice %60 {offsets = [0, 16], sizes = [16, 16], strides = [1, 1]} : vector<16x32xf32> to vector<16x16xf32>
      %81 = vector.shape_cast %80 : vector<16x16xf32> to vector<2x8x16xf32>
      %c1 = arith.constant 1 : index
      %c0_59 = arith.constant 0 : index
      %c0_60 = arith.constant 0 : index
      %c0_61 = arith.constant 0 : index
      %82 = vector.load %arg13[%c1, %c0_59, %c0_60, %c0_61] : memref<2x2x8x16xf32, #tpu.memory_space<vmem>>, vector<1x2x8x16xf32>
      %83 = vector.shape_cast %82 : vector<1x2x8x16xf32> to vector<2x8x16xf32>
      %84 = vector.shape_cast %81 : vector<2x8x16xf32> to vector<1x2x8x16xf32>
      tpu.vector_store %arg13[%c1, %c0_59, %c0_60, %c0_61], %84 {strides = array<i32>} : memref<2x2x8x16xf32, #tpu.memory_space<vmem>>, vector<1x2x8x16xf32>,
      %85 = vector.extract_strided_slice %62 {offsets = [0, 16], sizes = [16, 16], strides = [1, 1]} : vector<16x32xf32> to vector<16x16xf32>
      %86 = vector.shape_cast %85 : vector<16x16xf32> to vector<2x8x16xf32>
      %c1_62 = arith.constant 1 : index
      %c0_63 = arith.constant 0 : index
      %c0_64 = arith.constant 0 : index
      %c0_65 = arith.constant 0 : index
      %87 = vector.load %arg14[%c1_62, %c0_63, %c0_64, %c0_65] : memref<2x2x8x16xf32, #tpu.memory_space<vmem>>, vector<1x2x8x16xf32>
      %88 = vector.shape_cast %87 : vector<1x2x8x16xf32> to vector<2x8x16xf32>
      %89 = vector.shape_cast %86 : vector<2x8x16xf32> to vector<1x2x8x16xf32>
      tpu.vector_store %arg14[%c1_62, %c0_63, %c0_64, %c0_65], %89 {strides = array<i32>} : memref<2x2x8x16xf32, #tpu.memory_space<vmem>>, vector<1x2x8x16xf32>,
      %90 = vector.extract_strided_slice %64 {offsets = [0, 16], sizes = [16, 16], strides = [1, 1]} : vector<16x32xf32> to vector<16x16xf32>
      %91 = vector.shape_cast %90 : vector<16x16xf32> to vector<2x8x16xf32>
      %c1_66 = arith.constant 1 : index
      %c0_67 = arith.constant 0 : index
      %c0_68 = arith.constant 0 : index
      %c0_69 = arith.constant 0 : index
      %92 = vector.load %arg15[%c1_66, %c0_67, %c0_68, %c0_69] : memref<2x2x8x16xf32, #tpu.memory_space<vmem>>, vector<1x2x8x16xf32>
      %93 = vector.shape_cast %92 : vector<1x2x8x16xf32> to vector<2x8x16xf32>
      %94 = vector.shape_cast %91 : vector<2x8x16xf32> to vector<1x2x8x16xf32>
      tpu.vector_store %arg15[%c1_66, %c0_67, %c0_68, %c0_69], %94 {strides = array<i32>} : memref<2x2x8x16xf32, #tpu.memory_space<vmem>>, vector<1x2x8x16xf32>,
      %c0_70 = arith.constant 0 : index
      %c0_71 = arith.constant 0 : index
      %95 = vector.load %arg11[%c0_70, %c0_71] : memref<16x32xf32, #tpu.memory_space<vmem>>, vector<16x32xf32>
      tpu.vector_store %arg11[%c0_70, %c0_71], %34 {strides = array<i32>} : memref<16x32xf32, #tpu.memory_space<vmem>>, vector<16x32xf32>,
    } else {
    }
    %3 = arith.index_cast %arg1 : i32 to index
    %c0 = arith.constant 0 : index
    %c0_1 = arith.constant 0 : index
    %c0_2 = arith.constant 0 : index
    %4 = vector.load %arg13[%3, %c0, %c0_1, %c0_2] : memref<2x2x8x16xf32, #tpu.memory_space<vmem>>, vector<1x2x8x16xf32>
    %5 = vector.shape_cast %4 : vector<1x2x8x16xf32> to vector<2x8x16xf32>
    %6 = arith.index_cast %arg1 : i32 to index
    %c0_3 = arith.constant 0 : index
    %c0_4 = arith.constant 0 : index
    %c0_5 = arith.constant 0 : index
    %7 = vector.load %arg14[%6, %c0_3, %c0_4, %c0_5] : memref<2x2x8x16xf32, #tpu.memory_space<vmem>>, vector<1x2x8x16xf32>
    %8 = vector.shape_cast %7 : vector<1x2x8x16xf32> to vector<2x8x16xf32>
    %9 = arith.index_cast %arg1 : i32 to index
    %c0_6 = arith.constant 0 : index
    %c0_7 = arith.constant 0 : index
    %c0_8 = arith.constant 0 : index
    %10 = vector.load %arg15[%9, %c0_6, %c0_7, %c0_8] : memref<2x2x8x16xf32, #tpu.memory_space<vmem>>, vector<1x2x8x16xf32>
    %11 = vector.shape_cast %10 : vector<1x2x8x16xf32> to vector<2x8x16xf32>
    "tpu.trace_start"() <{level = 10 : i32, message = "bqd,bkd->bqk"}> : () -> ()
    %cst = arith.constant dense<0.000000e+00> : vector<2x8x8xf32>
    %12 = tpu.matmul %5, %8, %cst {dimension_numbers = #tpu.dot_dimension_numbers<[2], [2], [1], [1], [0, 0, 0, 1, 1, 1], [0], [0]>} : vector<2x8x16xf32>, vector<2x8x16xf32>, vector<2x8x8xf32> -> vector<2x8x8xf32>
    "tpu.trace_stop"() : () -> ()
    %cst_9 = arith.constant dense<0xFF800000> : vector<2x8xf32>
    %13 = vector.multi_reduction <maximumf>, %12, %cst_9 [2] : vector<2x8x8xf32> to vector<2x8xf32>
    %14 = vector.shape_cast %13 : vector<2x8xf32> to vector<2x8x1xf32>
    %15 = vector.broadcast %14 : vector<2x8x1xf32> to vector<2x8x8xf32>
    %16 = arith.subf %12, %15 : vector<2x8x8xf32>
    %17 = math.exp %16 : vector<2x8x8xf32>
    %cst_10 = arith.constant dense<0.000000e+00> : vector<2x8xf32>
    %18 = vector.multi_reduction <add>, %17, %cst_10 [2] : vector<2x8x8xf32> to vector<2x8xf32>
    %19 = vector.shape_cast %18 : vector<2x8xf32> to vector<2x8x1xf32>
    %20 = tpu.reciprocal %19 : vector<2x8x1xf32> -> vector<2x8x1xf32>
    %21 = vector.broadcast %20 : vector<2x8x1xf32> to vector<2x8x8xf32>
    %22 = arith.mulf %17, %21 : vector<2x8x8xf32>
    %23 = vector.shape_cast %22 : vector<2x8x8xf32> to vector<2x1x8x8xf32>
    %c0_11 = arith.constant 0 : index
    %c0_12 = arith.constant 0 : index
    %c0_13 = arith.constant 0 : index
    %c0_14 = arith.constant 0 : index
    %24 = vector.load %arg12[%c0_11, %c0_12, %c0_13, %c0_14] : memref<2x1x8x8xf32, #tpu.memory_space<vmem>>, vector<2x1x8x8xf32>
    tpu.vector_store %arg12[%c0_11, %c0_12, %c0_13, %c0_14], %23 {strides = array<i32>} : memref<2x1x8x8xf32, #tpu.memory_space<vmem>>, vector<2x1x8x8xf32>,
    "tpu.trace_start"() <{level = 10 : i32, message = "bqk,bkd->bqd"}> : () -> ()
    %cst_15 = arith.constant dense<0.000000e+00> : vector<2x8x16xf32>
    %25 = tpu.matmul %22, %11, %cst_15 {dimension_numbers = #tpu.dot_dimension_numbers<[2], [1], [1], [2], [0, 0, 0, 1, 1, 2], [0], [0]>} : vector<2x8x8xf32>, vector<2x8x16xf32>, vector<2x8x16xf32> -> vector<2x8x16xf32>
    "tpu.trace_stop"() : () -> ()
    %c0_16 = arith.constant 0 : index
    %c0_17 = arith.constant 0 : index
    %26 = vector.load %arg11[%c0_16, %c0_17] : memref<16x32xf32, #tpu.memory_space<vmem>>, vector<16x32xf32>
    %27 = vector.shape_cast %25 : vector<2x8x16xf32> to vector<16x16xf32>
    %28 = arith.index_cast %arg1 : i32 to index
    %c0_18 = arith.constant 0 : index
    %c0_19 = arith.constant 0 : index
    %29 = vector.load %arg8[%28, %c0_18, %c0_19] : memref<2x16x32xf32, #tpu.memory_space<vmem>>, vector<1x16x32xf32>
    %30 = vector.shape_cast %29 : vector<1x16x32xf32> to vector<16x32xf32>
    %cst_20 = arith.constant dense<0.000000e+00> : vector<16x32xf32>
    %31 = tpu.matmul %27, %30, %cst_20 {dimension_numbers = #tpu.dot_dimension_numbers<[1], [0], [0], [1], [0, 0, 1, 1], [], []>} : vector<16x16xf32>, vector<16x32xf32>, vector<16x32xf32> -> vector<16x32xf32>
    %32 = arith.addf %26, %31 : vector<16x32xf32>
    %c0_21 = arith.constant 0 : index
    %c0_22 = arith.constant 0 : index
    %33 = vector.load %arg11[%c0_21, %c0_22] : memref<16x32xf32, #tpu.memory_space<vmem>>, vector<16x32xf32>
    tpu.vector_store %arg11[%c0_21, %c0_22], %32 {strides = array<i32>} : memref<16x32xf32, #tpu.memory_space<vmem>>, vector<16x32xf32>,
    return
  }
  func.func @transform_0(%arg0: i32, %arg1: i32) -> (i32, i32) {
    %c0_i32 = arith.constant 0 : i32
    %c0_i32_0 = arith.constant 0 : i32
    return %arg0, %c0_i32 : i32, i32
  }
  func.func @transform_1(%arg0: i32, %arg1: i32) -> (i32, i32) {
    %c0_i32 = arith.constant 0 : i32
    %c0_i32_0 = arith.constant 0 : i32
    return %arg0, %c0_i32 : i32, i32
  }
  func.func @transform_2(%arg0: i32, %arg1: i32) -> (i32, i32) {
    %c0_i32 = arith.constant 0 : i32
    %c0_i32_0 = arith.constant 0 : i32
    return %arg0, %c0_i32 : i32, i32
  }
  func.func @transform_3(%arg0: i32, %arg1: i32) -> (i32, i32) {
    %c0_i32 = arith.constant 0 : i32
    %c0_i32_0 = arith.constant 0 : i32
    %c0_i32_1 = arith.constant 0 : i32
    return %c0_i32, %c0_i32_0 : i32, i32
  }
  func.func @transform_4(%arg0: i32, %arg1: i32) -> (i32, i32) {
    %c0_i32 = arith.constant 0 : i32
    %c0_i32_0 = arith.constant 0 : i32
    %c0_i32_1 = arith.constant 0 : i32
    return %c0_i32, %c0_i32_0 : i32, i32
  }
  func.func @transform_5(%arg0: i32, %arg1: i32) -> (i32, i32) {
    %c0_i32 = arith.constant 0 : i32
    %c0_i32_0 = arith.constant 0 : i32
    %c0_i32_1 = arith.constant 0 : i32
    return %c0_i32, %c0_i32_0 : i32, i32
  }
  func.func @transform_6(%arg0: i32, %arg1: i32) -> (i32, i32, i32) {
    %c0_i32 = arith.constant 0 : i32
    %c0_i32_0 = arith.constant 0 : i32
    %c0_i32_1 = arith.constant 0 : i32
    %c0_i32_2 = arith.constant 0 : i32
    return %c0_i32, %c0_i32_0, %c0_i32_1 : i32, i32, i32
  }
  func.func @transform_7(%arg0: i32, %arg1: i32) -> (i32, i32) {
    %c0_i32 = arith.constant 0 : i32
    %c0_i32_0 = arith.constant 0 : i32
    %c0_i32_1 = arith.constant 0 : i32
    return %c0_i32, %c0_i32_0 : i32, i32
  }
  func.func @transform_8(%arg0: i32, %arg1: i32) -> (i32, i32) {
    %c0_i32 = arith.constant 0 : i32
    %c0_i32_0 = arith.constant 0 : i32
    %c0_i32_1 = arith.constant 0 : i32
    return %c0_i32, %c0_i32_0 : i32, i32
  }
  func.func @transform_9(%arg0: i32, %arg1: i32) -> (i32, i32) {
    %c0_i32 = arith.constant 0 : i32
    %c0_i32_0 = arith.constant 0 : i32
    return %arg0, %c0_i32 : i32, i32
  }
  func.func @transform_10(%arg0: i32, %arg1: i32) -> (i32, i32, i32, i32) {
    %c0_i32 = arith.constant 0 : i32
    %c0_i32_0 = arith.constant 0 : i32
    %c0_i32_1 = arith.constant 0 : i32
    return %arg0, %arg1, %c0_i32, %c0_i32_0 : i32, i32, i32, i32
  }
}

</mosaic_0001>

<llo_original>
// kernel: tpu_custom_call.1
$region0: #{tpu_custom_call.1}
  #allocation0 [shape = 'u32[]', space=smem, size = 0x4, offset = 0x4, fixed_abs, tag = 'smem constant byte address 0x4 - core index']
  #allocation1 [shape = 'u32[144,128]{1,0:T(1,128)}', space=vmem, size = 0x12000, scoped, tag = 'internal scratch']
  #allocation2 [shape = 'f32[2,2,8,16]{3,2,1,0:T(8,128)}', space=vmem, size = 0x4000, scoped, tag = 'scratch operand']
  #allocation3 [shape = 'f32[2,2,8,16]{3,2,1,0:T(8,128)}', space=vmem, size = 0x4000, scoped, tag = 'scratch operand']
  #allocation4 [shape = 'f32[2,2,8,16]{3,2,1,0:T(8,128)}', space=vmem, size = 0x4000, scoped, tag = 'scratch operand']
  %s0 = inlined_call_operand.hbm [shape: f32[16,32], index: 0, kind: input, shape index: {}]
  %s1 = inlined_call_operand.hbm [shape: f32[16,32], index: 1, kind: input, shape index: {}]
  %s2 = inlined_call_operand.hbm [shape: f32[16,32], index: 2, kind: input, shape index: {}]
  %s3 = inlined_call_operand.hbm [shape: f32[32,32], index: 3, kind: input, shape index: {}]
  %s4 = inlined_call_operand.hbm [shape: f32[32,32], index: 4, kind: input, shape index: {}]
  %s5 = inlined_call_operand.hbm [shape: f32[32,32], index: 5, kind: input, shape index: {}]
  %s6 = inlined_call_operand.hbm [shape: f32[2,16,32], index: 6, kind: input, shape index: {}]
  %s7 = inlined_call_operand.vmem [shape: f32[1,32], index: 7, kind: input, shape index: {}]
  %s8 = inlined_call_operand.vmem [shape: f32[1,32], index: 8, kind: input, shape index: {}]
  %s9 = inlined_call_operand.hbm [shape: f32[16,32], index: 9, kind: output, shape index: {0}]
  %s10 = inlined_call_operand.hbm [shape: f32[2,2,8,8], index: 10, kind: output, shape index: {1}]
  %11 = xla_tuple %s9, %s10
  %s12 = sld [smem:[#allocation0]]
  $region109: #{tpu_custom_call.1} parent=0
    _
  %s14 = ssub.s32 1, %s12
  %s15 = scalar_select 0, %s14, %s12
  $region1: #{tpu_custom_call.1} parent=0
    #allocation5 [shape = 'u8[8192]{0}', space=vmem, size = 0x2000, scoped, tag = 'input window, operand 0, single buffered']
    #allocation6 [shape = 's32[2]{0}', space=sflag, size = 0x8, scoped, tag = 'scoped memory for tpu_custom_call.1']
    #allocation7 [shape = 's32[2]{0}', space=sflag, size = 0x8, scoped, tag = 'scoped memory for tpu_custom_call.1']
    #allocation8 [shape = 'u8[8192]{0}', space=vmem, size = 0x2000, scoped, tag = 'input window, operand 1, single buffered']
    #allocation9 [shape = 's32[1]{0}', space=sflag, size = 0x4, scoped, tag = 'scoped memory for tpu_custom_call.1']
    #allocation10 [shape = 'u8[8192]{0}', space=vmem, size = 0x2000, scoped, tag = 'input window, operand 2, single buffered']
    #allocation11 [shape = 'u8[16384]{0}', space=vmem, size = 0x4000, scoped, tag = 'input window, operand 3, single buffered']
    #allocation12 [shape = 's32[1]{0}', space=sflag, size = 0x4, scoped, tag = 'scoped memory for tpu_custom_call.1']
    #allocation13 [shape = 'u8[16384]{0}', space=vmem, size = 0x4000, scoped, tag = 'input window, operand 4, single buffered']
    #allocation14 [shape = 'u8[16384]{0}', space=vmem, size = 0x4000, scoped, tag = 'input window, operand 5, single buffered']
    #allocation15 [shape = 's32[1]{0}', space=sflag, size = 0x4, scoped, tag = 'scoped memory for tpu_custom_call.1']
    #allocation16 [shape = 'u8[16384]{0}', space=vmem, size = 0x4000, scoped, tag = 'input window, operand 6, single buffered']
    #allocation17 [shape = 'u8[8192]{0}', space=vmem, size = 0x2000, scoped, tag = 'output window, operand 0, single buffered']
    #allocation18 [shape = 'u8[16384]{0}', space=vmem, size = 0x4000, scoped, tag = 'output window, operand 1']
    #allocation19 [shape = 's32[2]{0}', space=sflag, size = 0x8, scoped, tag = 'scoped memory for tpu_custom_call.1']
    %16 = vsyncpa [#allocation6], 0
    %17 = vsyncpa [#allocation9], 0
    %18 = vsyncpa [#allocation12], 0
    %19 = vsyncpa [#allocation15], 0
    %20 = vsyncpa [#allocation7], 0
    %21 = vsyncpa [#allocation19], 0
    %s22 = scalar_lea.sflag [#allocation19], 1
    %23 = vsyncpa %s22, 0
    loop: start=0, step=1, limit=4
    $region2: #{tpu_custom_call.1} parent=1 // loop_pre_header
      _
    $region3: #{tpu_custom_call.1} parent=1 // loop_header
      %s25 = sphi 0, %s29
      %p26 = scmp.ge.s32.totalorder %s25, 4
      %s32 = sphi 0, %s44
      %s33 = sphi 0, %s40
      %s34 = sphi 0, %s32
      %s35 = sphi 0, %s33
      %s36 = sphi 0, %s34
      %s37 = sphi 0, %s35
      %s47 = sphi 0, %s49
      %s50 = sphi 0, %s47
      %s51 = sphi 0, %s50
      %s67 = sphi 0, %s51
      %s73 = sphi 0, %s75
      %s76 = sphi 0, %s73
      %s77 = sphi 0, %s76
      %s93 = sphi 0, %s77
      %s99 = sphi 0, %s101
      %s102 = sphi 0, %s99
      %s103 = sphi 0, %s102
      %s119 = sphi 0, %s103
      %s123 = sphi 0, %s123
      %s125 = sphi 0, %s123
      %s126 = sphi 0, %s125
      %s140 = sphi 0, %s126
      %s144 = sphi 0, %s144
      %s146 = sphi 0, %s144
      %s147 = sphi 0, %s146
      %s161 = sphi 0, %s147
      %s165 = sphi 0, %s165
      %s167 = sphi 0, %s165
      %s168 = sphi 0, %s167
      %s182 = sphi 0, %s168
      %s186 = sphi 0, %s186
      %s188 = sphi 0, %s186
      %s189 = sphi 0, %s188
      %s203 = sphi 0, %s189
      %s207 = sphi 0, %s207
      %s209 = sphi 0, %s207
      %s210 = sphi 0, %s209
      %s224 = sphi 0, %s210
      %s228 = sphi 0, %s228
      %s230 = sphi 0, %s228
      %s231 = sphi 0, %s230
      %s245 = sphi 0, %s231
      %s251 = sphi 0, %s253
      %s254 = sphi 0, %s251
      %s255 = sphi 0, %s254
      %s271 = sphi 0, %s255
      %s279 = sphi 0, %s281
      %s282 = sphi 0, %s279
      %s283 = sphi 0, %s282
      %s299 = sphi 0, %s283
    $region4: #{tpu_custom_call.1} parent=1 // loop_header_branch
      %28 = sbr.rel (%p26) target = $region8
    $region5: #{tpu_custom_call.1} parent=1 // loop_body
      %s30 = ssub.s32 %s25, 1
      %s31 = ssub.s32 %s25, 2
      %s38 = sadd.s32 1, %s33
      %p39 = scmp.ge.s32.totalorder %s38, 2
      %s40 = scalar_select %p39, 0, %s38
      %s41 = sadd.s32 1, %s32
      %s42 = scalar_select %p39, %s41, %s32
      %p43 = scmp.ge.s32.totalorder %s42, 1
      %s44 = scalar_select %p43, 0, %s42
      %s45 = ssub.s32 %s32, %s44
      %p46 = scmp.eq.s32.totalorder %s45, 0
      %s48 = sadd.s32 %s47, 1
      %s49 = scalar_select %p46, %s47, %s48
      %p52 = pneg %p46
      %p53 = scmp.eq.s32.totalorder %s25, 1
      %p54 = por %p52, %p53
      %p55 = scmp.ne.s32.totalorder %s47, %s50
      %p56 = scmp.eq.s32.totalorder %s25, 0
      %p57 = por %p55, %p56
      %p58 = scmp.ne.s32.totalorder %s47, %s50
      %p59 = scmp.eq.s32.totalorder %s30, 1
      %p60 = por %p58, %p59
      %p61 = scmp.ne.s32.totalorder %s50, %s51
      %p62 = scmp.eq.s32.totalorder %s30, 0
      %p63 = por %p61, %p62
      %p64 = scmp.ne.s32.totalorder %s50, %s51
      %p65 = scmp.eq.s32.totalorder %s31, 1
      %p66 = por %p64, %p65
      %p68 = scmp.ne.s32.totalorder %s51, %s67
      %p69 = scmp.eq.s32.totalorder %s31, 0
      %p70 = por %p68, %p69
      %s71 = ssub.s32 %s32, %s44
      %p72 = scmp.eq.s32.totalorder %s71, 0
      %s74 = sadd.s32 %s73, 1
      %s75 = scalar_select %p72, %s73, %s74
      %p78 = pneg %p72
      %p79 = scmp.eq.s32.totalorder %s25, 1
      %p80 = por %p78, %p79
      %p81 = scmp.ne.s32.totalorder %s73, %s76
      %p82 = scmp.eq.s32.totalorder %s25, 0
      %p83 = por %p81, %p82
      %p84 = scmp.ne.s32.totalorder %s73, %s76
      %p85 = scmp.eq.s32.totalorder %s30, 1
      %p86 = por %p84, %p85
      %p87 = scmp.ne.s32.totalorder %s76, %s77
      %p88 = scmp.eq.s32.totalorder %s30, 0
      %p89 = por %p87, %p88
      %p90 = scmp.ne.s32.totalorder %s76, %s77
      %p91 = scmp.eq.s32.totalorder %s31, 1
      %p92 = por %p90, %p91
      %p94 = scmp.ne.s32.totalorder %s77, %s93
      %p95 = scmp.eq.s32.totalorder %s31, 0
      %p96 = por %p94, %p95
      %s97 = ssub.s32 %s32, %s44
      %p98 = scmp.eq.s32.totalorder %s97, 0
      %s100 = sadd.s32 %s99, 1
      %s101 = scalar_select %p98, %s99, %s100
      %p104 = pneg %p98
      %p105 = scmp.eq.s32.totalorder %s25, 1
      %p106 = por %p104, %p105
      %p107 = scmp.ne.s32.totalorder %s99, %s102
      %p108 = scmp.eq.s32.totalorder %s25, 0
      %p109 = por %p107, %p108
      %p110 = scmp.ne.s32.totalorder %s99, %s102
      %p111 = scmp.eq.s32.totalorder %s30, 1
      %p112 = por %p110, %p111
      %p113 = scmp.ne.s32.totalorder %s102, %s103
      %p114 = scmp.eq.s32.totalorder %s30, 0
      %p115 = por %p113, %p114
      %p116 = scmp.ne.s32.totalorder %s102, %s103
      %p117 = scmp.eq.s32.totalorder %s31, 1
      %p118 = por %p116, %p117
      %p120 = scmp.ne.s32.totalorder %s103, %s119
      %p121 = scmp.eq.s32.totalorder %s31, 0
      %p122 = por %p120, %p121
      %s124 = sadd.s32 %s123, 1
      %p127 = scmp.eq.s32.totalorder %s25, 1
      %p128 = scmp.ne.s32.totalorder %s123, %s125
      %p129 = scmp.eq.s32.totalorder %s25, 0
      %p130 = por %p128, %p129
      %p131 = scmp.ne.s32.totalorder %s123, %s125
      %p132 = scmp.eq.s32.totalorder %s30, 1
      %p133 = por %p131, %p132
      %p134 = scmp.ne.s32.totalorder %s125, %s126
      %p135 = scmp.eq.s32.totalorder %s30, 0
      %p136 = por %p134, %p135
      %p137 = scmp.ne.s32.totalorder %s125, %s126
      %p138 = scmp.eq.s32.totalorder %s31, 1
      %p139 = por %p137, %p138
      %p141 = scmp.ne.s32.totalorder %s126, %s140
      %p142 = scmp.eq.s32.totalorder %s31, 0
      %p143 = por %p141, %p142
      %s145 = sadd.s32 %s144, 1
      %p148 = scmp.eq.s32.totalorder %s25, 1
      %p149 = scmp.ne.s32.totalorder %s144, %s146
      %p150 = scmp.eq.s32.totalorder %s25, 0
      %p151 = por %p149, %p150
      %p152 = scmp.ne.s32.totalorder %s144, %s146
      %p153 = scmp.eq.s32.totalorder %s30, 1
      %p154 = por %p152, %p153
      %p155 = scmp.ne.s32.totalorder %s146, %s147
      %p156 = scmp.eq.s32.totalorder %s30, 0
      %p157 = por %p155, %p156
      %p158 = scmp.ne.s32.totalorder %s146, %s147
      %p159 = scmp.eq.s32.totalorder %s31, 1
      %p160 = por %p158, %p159
      %p162 = scmp.ne.s32.totalorder %s147, %s161
      %p163 = scmp.eq.s32.totalorder %s31, 0
      %p164 = por %p162, %p163
      %s166 = sadd.s32 %s165, 1
      %p169 = scmp.eq.s32.totalorder %s25, 1
      %p170 = scmp.ne.s32.totalorder %s165, %s167
      %p171 = scmp.eq.s32.totalorder %s25, 0
      %p172 = por %p170, %p171
      %p173 = scmp.ne.s32.totalorder %s165, %s167
      %p174 = scmp.eq.s32.totalorder %s30, 1
      %p175 = por %p173, %p174
      %p176 = scmp.ne.s32.totalorder %s167, %s168
      %p177 = scmp.eq.s32.totalorder %s30, 0
      %p178 = por %p176, %p177
      %p179 = scmp.ne.s32.totalorder %s167, %s168
      %p180 = scmp.eq.s32.totalorder %s31, 1
      %p181 = por %p179, %p180
      %p183 = scmp.ne.s32.totalorder %s168, %s182
      %p184 = scmp.eq.s32.totalorder %s31, 0
      %p185 = por %p183, %p184
      %s187 = sadd.s32 %s186, 1
      %p190 = scmp.eq.s32.totalorder %s25, 1
      %p191 = scmp.ne.s32.totalorder %s186, %s188
      %p192 = scmp.eq.s32.totalorder %s25, 0
      %p193 = por %p191, %p192
      %p194 = scmp.ne.s32.totalorder %s186, %s188
      %p195 = scmp.eq.s32.totalorder %s30, 1
      %p196 = por %p194, %p195
      %p197 = scmp.ne.s32.totalorder %s188, %s189
      %p198 = scmp.eq.s32.totalorder %s30, 0
      %p199 = por %p197, %p198
      %p200 = scmp.ne.s32.totalorder %s188, %s189
      %p201 = scmp.eq.s32.totalorder %s31, 1
      %p202 = por %p200, %p201
      %p204 = scmp.ne.s32.totalorder %s189, %s203
      %p205 = scmp.eq.s32.totalorder %s31, 0
      %p206 = por %p204, %p205
      %s208 = sadd.s32 %s207, 1
      %p211 = scmp.eq.s32.totalorder %s25, 1
      %p212 = scmp.ne.s32.totalorder %s207, %s209
      %p213 = scmp.eq.s32.totalorder %s25, 0
      %p214 = por %p212, %p213
      %p215 = scmp.ne.s32.totalorder %s207, %s209
      %p216 = scmp.eq.s32.totalorder %s30, 1
      %p217 = por %p215, %p216
      %p218 = scmp.ne.s32.totalorder %s209, %s210
      %p219 = scmp.eq.s32.totalorder %s30, 0
      %p220 = por %p218, %p219
      %p221 = scmp.ne.s32.totalorder %s209, %s210
      %p222 = scmp.eq.s32.totalorder %s31, 1
      %p223 = por %p221, %p222
      %p225 = scmp.ne.s32.totalorder %s210, %s224
      %p226 = scmp.eq.s32.totalorder %s31, 0
      %p227 = por %p225, %p226
      %s229 = sadd.s32 %s228, 1
      %p232 = scmp.eq.s32.totalorder %s25, 1
      %p233 = scmp.ne.s32.totalorder %s228, %s230
      %p234 = scmp.eq.s32.totalorder %s25, 0
      %p235 = por %p233, %p234
      %p236 = scmp.ne.s32.totalorder %s228, %s230
      %p237 = scmp.eq.s32.totalorder %s30, 1
      %p238 = por %p236, %p237
      %p239 = scmp.ne.s32.totalorder %s230, %s231
      %p240 = scmp.eq.s32.totalorder %s30, 0
      %p241 = por %p239, %p240
      %p242 = scmp.ne.s32.totalorder %s230, %s231
      %p243 = scmp.eq.s32.totalorder %s31, 1
      %p244 = por %p242, %p243
      %p246 = scmp.ne.s32.totalorder %s231, %s245
      %p247 = scmp.eq.s32.totalorder %s31, 0
      %p248 = por %p246, %p247
      %s249 = ssub.s32 %s32, %s44
      %p250 = scmp.eq.s32.totalorder %s249, 0
      %s252 = sadd.s32 %s251, 1
      %s253 = scalar_select %p250, %s251, %s252
      %p256 = pneg %p250
      %p257 = scmp.eq.s32.totalorder %s25, 1
      %p258 = por %p256, %p257
      %p259 = scmp.ne.s32.totalorder %s251, %s254
      %p260 = scmp.eq.s32.totalorder %s25, 0
      %p261 = por %p259, %p260
      %p262 = scmp.ne.s32.totalorder %s251, %s254
      %p263 = scmp.eq.s32.totalorder %s30, 1
      %p264 = por %p262, %p263
      %p265 = scmp.ne.s32.totalorder %s254, %s255
      %p266 = scmp.eq.s32.totalorder %s30, 0
      %p267 = por %p265, %p266
      %p268 = scmp.ne.s32.totalorder %s254, %s255
      %p269 = scmp.eq.s32.totalorder %s31, 1
      %p270 = por %p268, %p269
      %p272 = scmp.ne.s32.totalorder %s255, %s271
      %p273 = scmp.eq.s32.totalorder %s31, 0
      %p274 = por %p272, %p273
      %s275 = ssub.s32 %s32, %s44
      %s276 = ssub.s32 %s33, %s40
      %s277 = sor.u32 %s275, %s276
      %p278 = scmp.eq.s32.totalorder %s277, 0
      %s280 = sadd.s32 %s279, 1
      %s281 = scalar_select %p278, %s279, %s280
      %p284 = pneg %p278
      %p285 = scmp.eq.s32.totalorder %s25, 1
      %p286 = por %p284, %p285
      %p287 = scmp.ne.s32.totalorder %s279, %s282
      %p288 = scmp.eq.s32.totalorder %s25, 0
      %p289 = por %p287, %p288
      %p290 = scmp.ne.s32.totalorder %s279, %s282
      %p291 = scmp.eq.s32.totalorder %s30, 1
      %p292 = por %p290, %p291
      %p293 = scmp.ne.s32.totalorder %s282, %s283
      %p294 = scmp.eq.s32.totalorder %s30, 0
      %p295 = por %p293, %p294
      %p296 = scmp.ne.s32.totalorder %s282, %s283
      %p297 = scmp.eq.s32.totalorder %s31, 1
      %p298 = por %p296, %p297
      %p300 = scmp.ne.s32.totalorder %s283, %s299
      %p301 = scmp.eq.s32.totalorder %s31, 0
      %p302 = por %p300, %p301
      %p303 = scmp.le.s32.totalorder 1, %s25
      %p304 = scmp.lt.s32.totalorder %s25, 3
      %p305 = pnand %p303, %p304
      %p306 = pneg %p305
      // Predicated region
      $region9: #{tpu_custom_call.1} parent=5 // pred_check
        _
      $region10: #{tpu_custom_call.1} parent=5 // pred_check_branch
        %308 = sbr.rel (%p305) target = $region12
      $region11: #{tpu_custom_call.1} parent=5 // pred_region
        %s309 = ssub.s32 %s25, 1
        // Predicated region
        $region13: #{tpu_custom_call.1} parent=11 // pred_check
          %p310 = pneg %p63
        $region14: #{tpu_custom_call.1} parent=11 // pred_check_branch
          %312 = sbr.rel (%p310) target = $region16
        $region15: #{tpu_custom_call.1} parent=11 // pred_region
          %s313 = smul.u32 2, %s34
          %s315 = ssub.s32 256, 256
          %316 = vsyncadd [#allocation6], %s315
          %s317 = smul.addr %s313, 128
          %s318 = scalar_lea.hbm %s0, %s317
          %s319 = sshll.u32 [#allocation5], 4
          %s320 = int_to_ptr.vmem [resolvable:$true] %s319
          %325 = dma.hbm_to_vmem [thread:$0]  %s318, 256, %s320, [#allocation6], 128, 128, 8
        $region16: #{tpu_custom_call.1} parent=11 // pred_fallthru
          _
        // Predicated region
        $region17: #{tpu_custom_call.1} parent=11 // pred_check
          %p326 = pneg %p89
        $region18: #{tpu_custom_call.1} parent=11 // pred_check_branch
          %328 = sbr.rel (%p326) target = $region20
        $region19: #{tpu_custom_call.1} parent=11 // pred_region
          %s329 = smul.u32 2, %s34
          %s331 = ssub.s32 256, 256
          %332 = vsyncadd [#allocation9], %s331
          %s333 = smul.addr %s329, 128
          %s334 = scalar_lea.hbm %s1, %s333
          %s335 = sshll.u32 [#allocation8], 4
          %s336 = int_to_ptr.vmem [resolvable:$true] %s335
          %341 = dma.hbm_to_vmem [thread:$0]  %s334, 256, %s336, [#allocation9], 128, 128, 8
        $region20: #{tpu_custom_call.1} parent=11 // pred_fallthru
          _
        // Predicated region
        $region21: #{tpu_custom_call.1} parent=11 // pred_check
          %p342 = pneg %p115
        $region22: #{tpu_custom_call.1} parent=11 // pred_check_branch
          %344 = sbr.rel (%p342) target = $region24
        $region23: #{tpu_custom_call.1} parent=11 // pred_region
          %s345 = smul.u32 2, %s34
          %s347 = ssub.s32 256, 256
          %348 = vsyncadd [#allocation9], %s347
          %s349 = smul.addr %s345, 128
          %s350 = scalar_lea.hbm %s2, %s349
          %s351 = sshll.u32 [#allocation10], 4
          %s352 = int_to_ptr.vmem [resolvable:$true] %s351
          %357 = dma.hbm_to_vmem [thread:$0]  %s350, 256, %s352, [#allocation9], 128, 128, 8
        $region24: #{tpu_custom_call.1} parent=11 // pred_fallthru
          _
        // Predicated region
        $region25: #{tpu_custom_call.1} parent=11 // pred_check
          %p358 = pneg %p136
        $region26: #{tpu_custom_call.1} parent=11 // pred_check_branch
          %360 = sbr.rel (%p358) target = $region28
        $region27: #{tpu_custom_call.1} parent=11 // pred_region
          %s362 = ssub.s32 512, 512
          %363 = vsyncadd [#allocation12], %s362
          %s364 = sshll.u32 [#allocation11], 4
          %s365 = int_to_ptr.vmem [resolvable:$true] %s364
          %370 = dma.hbm_to_vmem [thread:$0]  %s3, 512, %s365, [#allocation12], 128, 128, 8
        $region28: #{tpu_custom_call.1} parent=11 // pred_fallthru
          _
        // Predicated region
        $region29: #{tpu_custom_call.1} parent=11 // pred_check
          %p371 = pneg %p157
        $region30: #{tpu_custom_call.1} parent=11 // pred_check_branch
          %373 = sbr.rel (%p371) target = $region32
        $region31: #{tpu_custom_call.1} parent=11 // pred_region
          %s375 = ssub.s32 512, 512
          %376 = vsyncadd [#allocation12], %s375
          %s377 = sshll.u32 [#allocation13], 4
          %s378 = int_to_ptr.vmem [resolvable:$true] %s377
          %383 = dma.hbm_to_vmem [thread:$0]  %s4, 512, %s378, [#allocation12], 128, 128, 8
        $region32: #{tpu_custom_call.1} parent=11 // pred_fallthru
          _
        // Predicated region
        $region33: #{tpu_custom_call.1} parent=11 // pred_check
          %p384 = pneg %p178
        $region34: #{tpu_custom_call.1} parent=11 // pred_check_branch
          %386 = sbr.rel (%p384) target = $region36
        $region35: #{tpu_custom_call.1} parent=11 // pred_region
          %s388 = ssub.s32 512, 512
          %389 = vsyncadd [#allocation15], %s388
          %s390 = sshll.u32 [#allocation14], 4
          %s391 = int_to_ptr.vmem [resolvable:$true] %s390
          %396 = dma.hbm_to_vmem [thread:$0]  %s5, 512, %s391, [#allocation15], 128, 128, 8
        $region36: #{tpu_custom_call.1} parent=11 // pred_fallthru
          _
        // Predicated region
        $region37: #{tpu_custom_call.1} parent=11 // pred_check
          %p397 = pneg %p199
        $region38: #{tpu_custom_call.1} parent=11 // pred_check_branch
          %399 = sbr.rel (%p397) target = $region40
        $region39: #{tpu_custom_call.1} parent=11 // pred_region
          %s401 = ssub.s32 512, 512
          %402 = vsyncadd [#allocation15], %s401
          %s403 = sshll.u32 [#allocation16], 4
          %s404 = int_to_ptr.vmem [resolvable:$true] %s403
          %409 = dma.hbm_to_vmem [thread:$0]  %s6, 512, %s404, [#allocation15], 128, 128, 8
        $region40: #{tpu_custom_call.1} parent=11 // pred_fallthru
          _
        // Predicated region
        $region41: #{tpu_custom_call.1} parent=11 // pred_check
          %p410 = pneg %p220
        $region42: #{tpu_custom_call.1} parent=11 // pred_check_branch
          %412 = sbr.rel (%p410) target = $region44
        $region43: #{tpu_custom_call.1} parent=11 // pred_region
          _
        $region44: #{tpu_custom_call.1} parent=11 // pred_fallthru
          _
        // Predicated region
        $region45: #{tpu_custom_call.1} parent=11 // pred_check
          %p413 = pneg %p241
        $region46: #{tpu_custom_call.1} parent=11 // pred_check_branch
          %415 = sbr.rel (%p413) target = $region48
        $region47: #{tpu_custom_call.1} parent=11 // pred_region
          _
        $region48: #{tpu_custom_call.1} parent=11 // pred_fallthru
          _
      $region12: #{tpu_custom_call.1} parent=5 // pred_fallthru
        _
      %p416 = scmp.lt.s32.totalorder %s25, 2
      // Predicated region
      $region49: #{tpu_custom_call.1} parent=5 // pred_check
        %p417 = pneg %p416
      $region50: #{tpu_custom_call.1} parent=5 // pred_check_branch
        %419 = sbr.rel (%p417) target = $region52
      $region51: #{tpu_custom_call.1} parent=5 // pred_region
        _
      $region52: #{tpu_custom_call.1} parent=5 // pred_fallthru
        _
      %p420 = scmp.le.s32.totalorder 1, %s25
      %p421 = scmp.lt.s32.totalorder %s25, 3
      %p422 = pnand %p420, %p421
      %p423 = pneg %p422
      // Predicated region
      $region53: #{tpu_custom_call.1} parent=5 // pred_check
        _
      $region54: #{tpu_custom_call.1} parent=5 // pred_check_branch
        %425 = sbr.rel (%p422) target = $region56
      $region55: #{tpu_custom_call.1} parent=5 // pred_region
        %s426 = ssub.s32 %s25, 1
        // Predicated region
        $region57: #{tpu_custom_call.1} parent=55 // pred_check
          %p427 = pneg %p63
        $region58: #{tpu_custom_call.1} parent=55 // pred_check_branch
          %429 = sbr.rel (%p427) target = $region60
        $region59: #{tpu_custom_call.1} parent=55 // pred_region
          %430 = dma.done [#allocation6], 256
        $region60: #{tpu_custom_call.1} parent=55 // pred_fallthru
          _
        // Predicated region
        $region61: #{tpu_custom_call.1} parent=55 // pred_check
          %p431 = pneg %p89
        $region62: #{tpu_custom_call.1} parent=55 // pred_check_branch
          %433 = sbr.rel (%p431) target = $region64
        $region63: #{tpu_custom_call.1} parent=55 // pred_region
          %434 = dma.done [#allocation9], 256
        $region64: #{tpu_custom_call.1} parent=55 // pred_fallthru
          _
        // Predicated region
        $region65: #{tpu_custom_call.1} parent=55 // pred_check
          %p435 = pneg %p115
        $region66: #{tpu_custom_call.1} parent=55 // pred_check_branch
          %437 = sbr.rel (%p435) target = $region68
        $region67: #{tpu_custom_call.1} parent=55 // pred_region
          %438 = dma.done [#allocation9], 256
        $region68: #{tpu_custom_call.1} parent=55 // pred_fallthru
          _
        // Predicated region
        $region69: #{tpu_custom_call.1} parent=55 // pred_check
          %p439 = pneg %p136
        $region70: #{tpu_custom_call.1} parent=55 // pred_check_branch
          %441 = sbr.rel (%p439) target = $region72
        $region71: #{tpu_custom_call.1} parent=55 // pred_region
          %442 = dma.done [#allocation12], 512
        $region72: #{tpu_custom_call.1} parent=55 // pred_fallthru
          _
        // Predicated region
        $region73: #{tpu_custom_call.1} parent=55 // pred_check
          %p443 = pneg %p157
        $region74: #{tpu_custom_call.1} parent=55 // pred_check_branch
          %445 = sbr.rel (%p443) target = $region76
        $region75: #{tpu_custom_call.1} parent=55 // pred_region
          %446 = dma.done [#allocation12], 512
        $region76: #{tpu_custom_call.1} parent=55 // pred_fallthru
          _
        // Predicated region
        $region77: #{tpu_custom_call.1} parent=55 // pred_check
          %p447 = pneg %p178
        $region78: #{tpu_custom_call.1} parent=55 // pred_check_branch
          %449 = sbr.rel (%p447) target = $region80
        $region79: #{tpu_custom_call.1} parent=55 // pred_region
          %450 = dma.done [#allocation15], 512
        $region80: #{tpu_custom_call.1} parent=55 // pred_fallthru
          _
        // Predicated region
        $region81: #{tpu_custom_call.1} parent=55 // pred_check
          %p451 = pneg %p199
        $region82: #{tpu_custom_call.1} parent=55 // pred_check_branch
          %453 = sbr.rel (%p451) target = $region84
        $region83: #{tpu_custom_call.1} parent=55 // pred_region
          %454 = dma.done [#allocation15], 512
        $region84: #{tpu_custom_call.1} parent=55 // pred_fallthru
          _
        %p455 = pneg %p63
        %p456 = pneg %p60
        %p457 = pneg %p89
        %p458 = pneg %p86
        %p459 = pneg %p115
        %p460 = pneg %p112
        %p461 = pneg %p136
        %p462 = pneg %p133
        %p463 = pneg %p157
        %p464 = pneg %p154
        %p465 = pneg %p178
        %p466 = pneg %p175
        %p467 = pneg %p199
        %p468 = pneg %p196
        %p469 = pneg %p220
        %p470 = pneg %p217
        %p471 = pneg %p241
        %p472 = pneg %p238
        %p473 = pneg %p267
        %p474 = pneg %p264
        %p475 = pneg %p295
        %p476 = pneg %p292
        %s477 = sand.u32 %s282, 1
        %s478 = scalar_lea.sflag [#allocation19], %s477
        %s479 = sand.u32 %s282, 1
        %s480 = smul.addr %s479, 16
        %s481 = scalar_lea.vmem [#allocation18], %s480
        %s482 = smul.u32 2, %s34
        %s483 = smul.u32 2, %s34
        %s484 = smul.u32 2, %s34
        %s485 = smul.u32 2, %s34
        %s486 = smul.u32 2, %s34
        %p487 = scmp.eq.s32.totalorder %s35, 0
        // Predicated region
        $region85: #{tpu_custom_call.1} parent=55 // pred_check
          %p488 = pneg %p487
        $region86: #{tpu_custom_call.1} parent=55 // pred_check_branch
          %490 = sbr.rel (%p488) target = $region88
        $region87: #{tpu_custom_call.1} parent=55 // pred_region
          %v491 = vld [vmem:[#allocation5] sm:$0xff]
          %v492 = vld [vmem:[#allocation5 + $0x8] sm:$0xff]
          %vm493 = vcmask 261120
          %v494 = vsel %vm493, %v491, 0.0
          %495 = vadd.xlane.f32.xlu0 %v494
          %v496 = vpop.xlane.xlu0 %495
          %v497 = vsel %vm493, %v492, 0.0
          %498 = vadd.xlane.f32.xlu0 %v497
          %v499 = vpop.xlane.xlu0 %498
          %v500 = vrcp.pop 32.0
          %v501 = vmul.f32 %v496, %v500
          %v502 = vmul.f32 %v499, %v500
          %v503 = vsub.f32 %v491, %v501
          %v504 = vsub.f32 %v492, %v502
          %v505 = vmul.f32 %v503, %v503
          %v506 = vmul.f32 %v504, %v504
          %v507 = vsel %vm493, %v505, 0.0
          %508 = vadd.xlane.f32.xlu0 %v507
          %v509 = vpop.xlane.xlu0 %508
          %v510 = vsel %vm493, %v506, 0.0
          %511 = vadd.xlane.f32.xlu0 %v510
          %v512 = vpop.xlane.xlu0 %511
          %v513 = vmul.f32 %v509, %v500
          %v514 = vmul.f32 %v512, %v500
          %v515 = vadd.f32 %v513, 1e-06
          %v516 = vadd.f32 %v514, 1e-06
          %v517 = vrsqrt.pop %v515
          %v518 = vrsqrt.pop %v516
          %v519 = vmul.f32 %v503, %v517
          %v520 = vmul.f32 %v504, %v518
          %v521 = vld [vmem:[%s7] sm:$0x1]
          %v523 = vlaneseq
          %v524 = vshrl.u32 %v523, 7
          %v525 = vsub.s32 0, %v524
          %v526 = vrot.slane %v521, %v525
          %v528 = vmul.f32 %v519, %v526
          %v529 = vmul.f32 %v520, %v526
          %v530 = vld [vmem:[%s8] sm:$0x1]
          %v532 = vlaneseq
          %v533 = vshrl.u32 %v532, 7
          %v534 = vsub.s32 0, %v533
          %v535 = vrot.slane %v530, %v534
          %v537 = vadd.f32 %v528, %v535
          %v538 = vadd.f32 %v529, %v535
          %v539 = vld [vmem:[#allocation8] sm:$0xff]
          %v540 = vld [vmem:[#allocation8 + $0x8] sm:$0xff]
          %v541 = vld [vmem:[#allocation10] sm:$0xff]
          %v542 = vld [vmem:[#allocation10 + $0x8] sm:$0xff]
          %v543 = vld [vmem:[#allocation11] sm:$0xff]
          %v544 = vld [vmem:[#allocation11 + $0x8] sm:$0xff]
          %v545 = vld [vmem:[#allocation11 + $0x10] sm:$0xff]
          %v546 = vld [vmem:[#allocation11 + $0x18] sm:$0xff]
          %v548 = vsel %vm493, %v537, 0
          %v551 = vsel %vm493, %v538, 0
          %553 = vmatprep.subr.mxu0 0.0
          %554 = vmatpush1.msra.mxu0 %v543
          %555 = vmatprep.subr.mxu0 0.0
          %556 = vmatpush1.msra.mxu0 %v544
          %557 = vmatprep.subr.mxu0 0.0
          %558 = vmatpush1.msra.mxu0 %v545
          %559 = vmatprep.subr.mxu0 0.0
          %560 = vmatpush1.msra.mxu0 %v546
          %561 = vmatprep.subr.mxu0 0.0
          %562 = vmatpush1.msra.mxu0 0.0
          %563 = vmatprep.subr.mxu0 0.0
          %564 = vmatpush1.msra.mxu0 0.0
          %565 = vmatprep.subr.mxu0 0.0
          %566 = vmatpush1.msra.mxu0 0.0
          %567 = vmatprep.subr.mxu0 0.0
          %568 = vmatpush1.msra.mxu0 0.0
          %569 = vmatprep.subr.mxu0 0.0
          %570 = vmatpush1.msra.mxu0 0.0
          %571 = vmatprep.subr.mxu0 0.0
          %572 = vmatpush1.msra.mxu0 0.0
          %573 = vmatprep.subr.mxu0 0.0
          %574 = vmatpush1.msra.mxu0 0.0
          %575 = vmatprep.subr.mxu0 0.0
          %576 = vmatpush1.msra.mxu0 0.0
          %577 = vmatprep.subr.mxu0 0.0
          %578 = vmatpush1.msra.mxu0 0.0
          %579 = vmatprep.subr.mxu0 0.0
          %580 = vmatpush1.msra.mxu0 0.0
          %581 = vmatprep.subr.mxu0 0.0
          %582 = vmatpush1.msra.mxu0 0.0
          %583 = vmatprep.subr.mxu0 0.0
          %584 = vmatpush1.msra.mxu0 0.0
          %585 = vmatprep.subr.mxu0 0.0
          %586 = vmatpush1.msra.mxu0 0.0
          %587 = vmatprep.subr.mxu0 0.0
          %588 = vmatpush1.msra.mxu0 0.0
          %589 = vmatprep.subr.mxu0 0.0
          %590 = vmatpush1.msra.mxu0 0.0
          %591 = vmatprep.subr.mxu0 0.0
          %592 = vmatpush1.msra.mxu0 0.0
          %593 = vmatprep.subr.mxu0 0.0
          %594 = vmatpush1.msra.mxu0 0.0
          %595 = vmatprep.subr.mxu0 0.0
          %596 = vmatpush1.msra.mxu0 0.0
          %597 = vmatprep.subr.mxu0 0.0
          %598 = vmatpush1.msra.mxu0 0.0
          %599 = vmatprep.subr.mxu0 0.0
          %600 = vmatpush1.msra.mxu0 0.0
          %601 = vmatprep.subr.mxu0 0.0
          %602 = vmatpush1.msra.mxu0 0.0
          %603 = vmatprep.subr.mxu0 0.0
          %604 = vmatpush1.msra.mxu0 0.0
          %605 = vmatprep.subr.mxu0 0.0
          %606 = vmatpush1.msra.mxu0 0.0
          %607 = vmatprep.subr.mxu0 0.0
          %608 = vmatpush1.msra.mxu0 0.0
          %609 = vmatprep.subr.mxu0 0.0
          %610 = vmatpush1.msra.mxu0 0.0
          %611 = vmatprep.subr.mxu0 0.0
          %612 = vmatpush1.msra.mxu0 0.0
          %613 = vmatprep.subr.mxu0 0.0
          %614 = vmatpush1.msra.mxu0 0.0
          %615 = vmatprep.subr.mxu0 0.0
          %616 = vmatpush1.msra.mxu0 0.0
          %617 = vmatprep.mubr.f32.mxu0 0.0
          %618 = vmatmul.mubr.f32.gmra.mrb[0].mxu0 %v548
          %v619 = vpop.f32.mrb[0].mxu0
          %v620 = vadd.f32 0.0, %v619
          %v621 = vpop.f32.mrb[0].mxu0
          %622 = vmatprep.mubr.f32.mxu0 0.0
          %623 = vmatmul.mubr.f32.gmra.mrb[0].mxu0 %v551
          %v624 = vpop.f32.mrb[0].mxu0
          %v625 = vadd.f32 0.0, %v624
          %v626 = vpop.f32.mrb[0].mxu0
          %627 = vdwg.mxu0
          %v628 = vld [vmem:[#allocation13] sm:$0xff]
          %v629 = vld [vmem:[#allocation13 + $0x8] sm:$0xff]
          %v630 = vld [vmem:[#allocation13 + $0x10] sm:$0xff]
          %v631 = vld [vmem:[#allocation13 + $0x18] sm:$0xff]
          %v633 = vsel %vm493, %v539, 0
          %v636 = vsel %vm493, %v540, 0
          %638 = vmatprep.subr.mxu0 0.0
          %639 = vmatpush1.msra.mxu0 %v628
          %640 = vmatprep.subr.mxu0 0.0
          %641 = vmatpush1.msra.mxu0 %v629
          %642 = vmatprep.subr.mxu0 0.0
          %643 = vmatpush1.msra.mxu0 %v630
          %644 = vmatprep.subr.mxu0 0.0
          %645 = vmatpush1.msra.mxu0 %v631
          %646 = vmatprep.subr.mxu0 0.0
          %647 = vmatpush1.msra.mxu0 0.0
          %648 = vmatprep.subr.mxu0 0.0
          %649 = vmatpush1.msra.mxu0 0.0
          %650 = vmatprep.subr.mxu0 0.0
          %651 = vmatpush1.msra.mxu0 0.0
          %652 = vmatprep.subr.mxu0 0.0
          %653 = vmatpush1.msra.mxu0 0.0
          %654 = vmatprep.subr.mxu0 0.0
          %655 = vmatpush1.msra.mxu0 0.0
          %656 = vmatprep.subr.mxu0 0.0
          %657 = vmatpush1.msra.mxu0 0.0
          %658 = vmatprep.subr.mxu0 0.0
          %659 = vmatpush1.msra.mxu0 0.0
          %660 = vmatprep.subr.mxu0 0.0
          %661 = vmatpush1.msra.mxu0 0.0
          %662 = vmatprep.subr.mxu0 0.0
          %663 = vmatpush1.msra.mxu0 0.0
          %664 = vmatprep.subr.mxu0 0.0
          %665 = vmatpush1.msra.mxu0 0.0
          %666 = vmatprep.subr.mxu0 0.0
          %667 = vmatpush1.msra.mxu0 0.0
          %668 = vmatprep.subr.mxu0 0.0
          %669 = vmatpush1.msra.mxu0 0.0
          %670 = vmatprep.subr.mxu0 0.0
          %671 = vmatpush1.msra.mxu0 0.0
          %672 = vmatprep.subr.mxu0 0.0
          %673 = vmatpush1.msra.mxu0 0.0
          %674 = vmatprep.subr.mxu0 0.0
          %675 = vmatpush1.msra.mxu0 0.0
          %676 = vmatprep.subr.mxu0 0.0
          %677 = vmatpush1.msra.mxu0 0.0
          %678 = vmatprep.subr.mxu0 0.0
          %679 = vmatpush1.msra.mxu0 0.0
          %680 = vmatprep.subr.mxu0 0.0
          %681 = vmatpush1.msra.mxu0 0.0
          %682 = vmatprep.subr.mxu0 0.0
          %683 = vmatpush1.msra.mxu0 0.0
          %684 = vmatprep.subr.mxu0 0.0
          %685 = vmatpush1.msra.mxu0 0.0
          %686 = vmatprep.subr.mxu0 0.0
          %687 = vmatpush1.msra.mxu0 0.0
          %688 = vmatprep.subr.mxu0 0.0
          %689 = vmatpush1.msra.mxu0 0.0
          %690 = vmatprep.subr.mxu0 0.0
          %691 = vmatpush1.msra.mxu0 0.0
          %692 = vmatprep.subr.mxu0 0.0
          %693 = vmatpush1.msra.mxu0 0.0
          %694 = vmatprep.subr.mxu0 0.0
          %695 = vmatpush1.msra.mxu0 0.0
          %696 = vmatprep.subr.mxu0 0.0
          %697 = vmatpush1.msra.mxu0 0.0
          %698 = vmatprep.subr.mxu0 0.0
          %699 = vmatpush1.msra.mxu0 0.0
          %700 = vmatprep.subr.mxu0 0.0
          %701 = vmatpush1.msra.mxu0 0.0
          %702 = vmatprep.mubr.f32.mxu0 0.0
          %703 = vmatmul.mubr.f32.gmra.mrb[0].mxu0 %v633
          %v704 = vpop.f32.mrb[0].mxu0
          %v705 = vadd.f32 0.0, %v704
          %v706 = vpop.f32.mrb[0].mxu0
          %707 = vmatprep.mubr.f32.mxu0 0.0
          %708 = vmatmul.mubr.f32.gmra.mrb[0].mxu0 %v636
          %v709 = vpop.f32.mrb[0].mxu0
          %v710 = vadd.f32 0.0, %v709
          %v711 = vpop.f32.mrb[0].mxu0
          %712 = vdwg.mxu0
          %v713 = vld [vmem:[#allocation14] sm:$0xff]
          %v714 = vld [vmem:[#allocation14 + $0x8] sm:$0xff]
          %v715 = vld [vmem:[#allocation14 + $0x10] sm:$0xff]
          %v716 = vld [vmem:[#allocation14 + $0x18] sm:$0xff]
          %v718 = vsel %vm493, %v541, 0
          %v721 = vsel %vm493, %v542, 0
          %723 = vmatprep.subr.mxu0 0.0
          %724 = vmatpush1.msra.mxu0 %v713
          %725 = vmatprep.subr.mxu0 0.0
          %726 = vmatpush1.msra.mxu0 %v714
          %727 = vmatprep.subr.mxu0 0.0
          %728 = vmatpush1.msra.mxu0 %v715
          %729 = vmatprep.subr.mxu0 0.0
          %730 = vmatpush1.msra.mxu0 %v716
          %731 = vmatprep.subr.mxu0 0.0
          %732 = vmatpush1.msra.mxu0 0.0
          %733 = vmatprep.subr.mxu0 0.0
          %734 = vmatpush1.msra.mxu0 0.0
          %735 = vmatprep.subr.mxu0 0.0
          %736 = vmatpush1.msra.mxu0 0.0
          %737 = vmatprep.subr.mxu0 0.0
          %738 = vmatpush1.msra.mxu0 0.0
          %739 = vmatprep.subr.mxu0 0.0
          %740 = vmatpush1.msra.mxu0 0.0
          %741 = vmatprep.subr.mxu0 0.0
          %742 = vmatpush1.msra.mxu0 0.0
          %743 = vmatprep.subr.mxu0 0.0
          %744 = vmatpush1.msra.mxu0 0.0
          %745 = vmatprep.subr.mxu0 0.0
          %746 = vmatpush1.msra.mxu0 0.0
          %747 = vmatprep.subr.mxu0 0.0
          %748 = vmatpush1.msra.mxu0 0.0
          %749 = vmatprep.subr.mxu0 0.0
          %750 = vmatpush1.msra.mxu0 0.0
          %751 = vmatprep.subr.mxu0 0.0
          %752 = vmatpush1.msra.mxu0 0.0
          %753 = vmatprep.subr.mxu0 0.0
          %754 = vmatpush1.msra.mxu0 0.0
          %755 = vmatprep.subr.mxu0 0.0
          %756 = vmatpush1.msra.mxu0 0.0
          %757 = vmatprep.subr.mxu0 0.0
          %758 = vmatpush1.msra.mxu0 0.0
          %759 = vmatprep.subr.mxu0 0.0
          %760 = vmatpush1.msra.mxu0 0.0
          %761 = vmatprep.subr.mxu0 0.0
          %762 = vmatpush1.msra.mxu0 0.0
          %763 = vmatprep.subr.mxu0 0.0
          %764 = vmatpush1.msra.mxu0 0.0
          %765 = vmatprep.subr.mxu0 0.0
          %766 = vmatpush1.msra.mxu0 0.0
          %767 = vmatprep.subr.mxu0 0.0
          %768 = vmatpush1.msra.mxu0 0.0
          %769 = vmatprep.subr.mxu0 0.0
          %770 = vmatpush1.msra.mxu0 0.0
          %771 = vmatprep.subr.mxu0 0.0
          %772 = vmatpush1.msra.mxu0 0.0
          %773 = vmatprep.subr.mxu0 0.0
          %774 = vmatpush1.msra.mxu0 0.0
          %775 = vmatprep.subr.mxu0 0.0
          %776 = vmatpush1.msra.mxu0 0.0
          %777 = vmatprep.subr.mxu0 0.0
          %778 = vmatpush1.msra.mxu0 0.0
          %779 = vmatprep.subr.mxu0 0.0
          %780 = vmatpush1.msra.mxu0 0.0
          %781 = vmatprep.subr.mxu0 0.0
          %782 = vmatpush1.msra.mxu0 0.0
          %783 = vmatprep.subr.mxu0 0.0
          %784 = vmatpush1.msra.mxu0 0.0
          %785 = vmatprep.subr.mxu0 0.0
          %786 = vmatpush1.msra.mxu0 0.0
          %787 = vmatprep.mubr.f32.mxu0 0.0
          %788 = vmatmul.mubr.f32.gmra.mrb[0].mxu0 %v718
          %v789 = vpop.f32.mrb[0].mxu0
          %v790 = vadd.f32 0.0, %v789
          %v791 = vpop.f32.mrb[0].mxu0
          %792 = vmatprep.mubr.f32.mxu0 0.0
          %793 = vmatmul.mubr.f32.gmra.mrb[0].mxu0 %v721
          %v794 = vpop.f32.mrb[0].mxu0
          %v795 = vadd.f32 0.0, %v794
          %v796 = vpop.f32.mrb[0].mxu0
          %797 = vdwg.mxu0
          %vm798 = vcmask 130048
          %799 = vst.msk [vmem:[#allocation2] sm:$0xff] %vm798, %v620
          %800 = vst.msk [vmem:[#allocation2 + $0x8] sm:$0xff] %vm798, %v625
          %801 = vst.msk [vmem:[#allocation3] sm:$0xff] %vm798, %v705
          %802 = vst.msk [vmem:[#allocation3 + $0x8] sm:$0xff] %vm798, %v710
          %803 = vst.msk [vmem:[#allocation4] sm:$0xff] %vm798, %v790
          %804 = vst.msk [vmem:[#allocation4 + $0x8] sm:$0xff] %vm798, %v795
          %807 = vrot.lane.b32.xlu0 %v620, 112
          %v808 = vpop.permute.xlu0 %807
          %809 = vrot.lane.b32.xlu0 %v625, 112
          %v810 = vpop.permute.xlu0 %809
          %s813 = scalar_lea.vmem [#allocation2], 16
          %814 = vst.msk [vmem:[%s813] sm:$0xff] %vm798, %v808
          %815 = vst.msk [vmem:[%s813 + $0x8] sm:$0xff] %vm798, %v810
          %818 = vrot.lane.b32.xlu0 %v705, 112
          %v819 = vpop.permute.xlu0 %818
          %820 = vrot.lane.b32.xlu0 %v710, 112
          %v821 = vpop.permute.xlu0 %820
          %s824 = scalar_lea.vmem [#allocation3], 16
          %825 = vst.msk [vmem:[%s824] sm:$0xff] %vm798, %v819
          %826 = vst.msk [vmem:[%s824 + $0x8] sm:$0xff] %vm798, %v821
          %829 = vrot.lane.b32.xlu0 %v790, 112
          %v830 = vpop.permute.xlu0 %829
          %831 = vrot.lane.b32.xlu0 %v795, 112
          %v832 = vpop.permute.xlu0 %831
          %s835 = scalar_lea.vmem [#allocation4], 16
          %836 = vst.msk [vmem:[%s835] sm:$0xff] %vm798, %v830
          %837 = vst.msk [vmem:[%s835 + $0x8] sm:$0xff] %vm798, %v832
          %838 = vst.msk [vmem:[#allocation17] sm:$0xff] %vm493, %v491
          %839 = vst.msk [vmem:[#allocation17 + $0x8] sm:$0xff] %vm493, %v492
        $region88: #{tpu_custom_call.1} parent=55 // pred_fallthru
          _
        %s840 = smul.u32 %s35, 16
        %s841 = scalar_lea.vmem [#allocation2], %s840
        %v842 = vld [vmem:[%s841] sm:$0xff]
        %v843 = vld [vmem:[%s841 + $0x8] sm:$0xff]
        %s844 = scalar_lea.vmem [#allocation3], %s840
        %v845 = vld [vmem:[%s844] sm:$0xff]
        %v846 = vld [vmem:[%s844 + $0x8] sm:$0xff]
        %s847 = scalar_lea.vmem [#allocation4], %s840
        %v848 = vld [vmem:[%s847] sm:$0xff]
        %v849 = vld [vmem:[%s847 + $0x8] sm:$0xff]
        %vm850 = vcmask 130048
        %v852 = vsel %vm850, %v842, 0
        %v855 = vsel %vm850, %v845, 0
        %857 = vmatprep.subr.mxu0 0.0
        %858 = vmatpush1.xpose.msra.mxu0 %v855
        %859 = vmatprep.subr.mxu0 0.0
        %860 = vmatpush1.xpose.msra.mxu0 0.0
        %861 = vmatprep.subr.mxu0 0.0
        %862 = vmatpush1.xpose.msra.mxu0 0.0
        %863 = vmatprep.subr.mxu0 0.0
        %864 = vmatpush1.xpose.msra.mxu0 0.0
        %865 = vmatprep.subr.mxu0 0.0
        %866 = vmatpush1.xpose.msra.mxu0 0.0
        %867 = vmatprep.subr.mxu0 0.0
        %868 = vmatpush1.xpose.msra.mxu0 0.0
        %869 = vmatprep.subr.mxu0 0.0
        %870 = vmatpush1.xpose.msra.mxu0 0.0
        %871 = vmatprep.subr.mxu0 0.0
        %872 = vmatpush1.xpose.msra.mxu0 0.0
        %873 = vmatprep.subr.mxu0 0.0
        %874 = vmatpush1.xpose.msra.mxu0 0.0
        %875 = vmatprep.subr.mxu0 0.0
        %876 = vmatpush1.xpose.msra.mxu0 0.0
        %877 = vmatprep.subr.mxu0 0.0
        %878 = vmatpush1.xpose.msra.mxu0 0.0
        %879 = vmatprep.subr.mxu0 0.0
        %880 = vmatpush1.xpose.msra.mxu0 0.0
        %881 = vmatprep.subr.mxu0 0.0
        %882 = vmatpush1.xpose.msra.mxu0 0.0
        %883 = vmatprep.subr.mxu0 0.0
        %884 = vmatpush1.xpose.msra.mxu0 0.0
        %885 = vmatprep.subr.mxu0 0.0
        %886 = vmatpush1.xpose.msra.mxu0 0.0
        %887 = vmatprep.subr.mxu0 0.0
        %888 = vmatpush1.xpose.msra.mxu0 0.0
        %889 = vmatprep.subr.mxu0 0.0
        %890 = vmatpush1.xpose.msra.mxu0 0.0
        %891 = vmatprep.subr.mxu0 0.0
        %892 = vmatpush1.xpose.msra.mxu0 0.0
        %893 = vmatprep.subr.mxu0 0.0
        %894 = vmatpush1.xpose.msra.mxu0 0.0
        %895 = vmatprep.subr.mxu0 0.0
        %896 = vmatpush1.xpose.msra.mxu0 0.0
        %897 = vmatprep.subr.mxu0 0.0
        %898 = vmatpush1.xpose.msra.mxu0 0.0
        %899 = vmatprep.subr.mxu0 0.0
        %900 = vmatpush1.xpose.msra.mxu0 0.0
        %901 = vmatprep.subr.mxu0 0.0
        %902 = vmatpush1.xpose.msra.mxu0 0.0
        %903 = vmatprep.subr.mxu0 0.0
        %904 = vmatpush1.xpose.msra.mxu0 0.0
        %905 = vmatprep.subr.mxu0 0.0
        %906 = vmatpush1.xpose.msra.mxu0 0.0
        %907 = vmatprep.subr.mxu0 0.0
        %908 = vmatpush1.xpose.msra.mxu0 0.0
        %909 = vmatprep.subr.mxu0 0.0
        %910 = vmatpush1.xpose.msra.mxu0 0.0
        %911 = vmatprep.subr.mxu0 0.0
        %912 = vmatpush1.xpose.msra.mxu0 0.0
        %913 = vmatprep.subr.mxu0 0.0
        %914 = vmatpush1.xpose.msra.mxu0 0.0
        %915 = vmatprep.subr.mxu0 0.0
        %916 = vmatpush1.xpose.msra.mxu0 0.0
        %917 = vmatprep.subr.mxu0 0.0
        %918 = vmatpush1.xpose.msra.mxu0 0.0
        %919 = vmatprep.subr.mxu0 0.0
        %920 = vmatpush1.xpose.msra.mxu0 0.0
        %921 = vmatprep.mubr.f32.mxu0 0.0
        %922 = vmatmul.mubr.f32.gmra.mrb[0].mxu0 %v852
        %v923 = vpop.f32.mrb[0].mxu0
        %v924 = vadd.f32 0.0, %v923
        %v925 = vpop.f32.mrb[0].mxu0
        %926 = vdwg.mxu0
        %v928 = vsel %vm850, %v843, 0
        %v931 = vsel %vm850, %v846, 0
        %933 = vmatprep.subr.mxu0 0.0
        %934 = vmatpush1.xpose.msra.mxu0 %v931
        %935 = vmatprep.subr.mxu0 0.0
        %936 = vmatpush1.xpose.msra.mxu0 0.0
        %937 = vmatprep.subr.mxu0 0.0
        %938 = vmatpush1.xpose.msra.mxu0 0.0
        %939 = vmatprep.subr.mxu0 0.0
        %940 = vmatpush1.xpose.msra.mxu0 0.0
        %941 = vmatprep.subr.mxu0 0.0
        %942 = vmatpush1.xpose.msra.mxu0 0.0
        %943 = vmatprep.subr.mxu0 0.0
        %944 = vmatpush1.xpose.msra.mxu0 0.0
        %945 = vmatprep.subr.mxu0 0.0
        %946 = vmatpush1.xpose.msra.mxu0 0.0
        %947 = vmatprep.subr.mxu0 0.0
        %948 = vmatpush1.xpose.msra.mxu0 0.0
        %949 = vmatprep.subr.mxu0 0.0
        %950 = vmatpush1.xpose.msra.mxu0 0.0
        %951 = vmatprep.subr.mxu0 0.0
        %952 = vmatpush1.xpose.msra.mxu0 0.0
        %953 = vmatprep.subr.mxu0 0.0
        %954 = vmatpush1.xpose.msra.mxu0 0.0
        %955 = vmatprep.subr.mxu0 0.0
        %956 = vmatpush1.xpose.msra.mxu0 0.0
        %957 = vmatprep.subr.mxu0 0.0
        %958 = vmatpush1.xpose.msra.mxu0 0.0
        %959 = vmatprep.subr.mxu0 0.0
        %960 = vmatpush1.xpose.msra.mxu0 0.0
        %961 = vmatprep.subr.mxu0 0.0
        %962 = vmatpush1.xpose.msra.mxu0 0.0
        %963 = vmatprep.subr.mxu0 0.0
        %964 = vmatpush1.xpose.msra.mxu0 0.0
        %965 = vmatprep.subr.mxu0 0.0
        %966 = vmatpush1.xpose.msra.mxu0 0.0
        %967 = vmatprep.subr.mxu0 0.0
        %968 = vmatpush1.xpose.msra.mxu0 0.0
        %969 = vmatprep.subr.mxu0 0.0
        %970 = vmatpush1.xpose.msra.mxu0 0.0
        %971 = vmatprep.subr.mxu0 0.0
        %972 = vmatpush1.xpose.msra.mxu0 0.0
        %973 = vmatprep.subr.mxu0 0.0
        %974 = vmatpush1.xpose.msra.mxu0 0.0
        %975 = vmatprep.subr.mxu0 0.0
        %976 = vmatpush1.xpose.msra.mxu0 0.0
        %977 = vmatprep.subr.mxu0 0.0
        %978 = vmatpush1.xpose.msra.mxu0 0.0
        %979 = vmatprep.subr.mxu0 0.0
        %980 = vmatpush1.xpose.msra.mxu0 0.0
        %981 = vmatprep.subr.mxu0 0.0
        %982 = vmatpush1.xpose.msra.mxu0 0.0
        %983 = vmatprep.subr.mxu0 0.0
        %984 = vmatpush1.xpose.msra.mxu0 0.0
        %985 = vmatprep.subr.mxu0 0.0
        %986 = vmatpush1.xpose.msra.mxu0 0.0
        %987 = vmatprep.subr.mxu0 0.0
        %988 = vmatpush1.xpose.msra.mxu0 0.0
        %989 = vmatprep.subr.mxu0 0.0
        %990 = vmatpush1.xpose.msra.mxu0 0.0
        %991 = vmatprep.subr.mxu0 0.0
        %992 = vmatpush1.xpose.msra.mxu0 0.0
        %993 = vmatprep.subr.mxu0 0.0
        %994 = vmatpush1.xpose.msra.mxu0 0.0
        %995 = vmatprep.subr.mxu0 0.0
        %996 = vmatpush1.xpose.msra.mxu0 0.0
        %997 = vmatprep.mubr.f32.mxu0 0.0
        %998 = vmatmul.mubr.f32.gmra.mrb[0].mxu0 %v928
        %v999 = vpop.f32.mrb[0].mxu0
        %v1000 = vadd.f32 0.0, %v999
        %v1001 = vpop.f32.mrb[0].mxu0
        %1002 = vdwg.mxu0
        %vm1003 = vcmask 64512
        %v1004 = vsel %vm1003, %v924, -inf
        %1005 = vmax.xlane.f32.xlu0 %v1004
        %v1006 = vpop.xlane.xlu0 %1005
        %v1007 = vsel %vm1003, %v1000, -inf
        %1008 = vmax.xlane.f32.xlu0 %v1007
        %v1009 = vpop.xlane.xlu0 %1008
        %v1010 = vsub.f32 %v924, %v1006
        %v1011 = vsub.f32 %v1000, %v1009
        %v1012 = vmul.f32 %v1010, 1.442695
        %v1013 = vpow.pop %v1012
        %v1014 = vmul.f32 %v1011, 1.442695
        %v1015 = vpow.pop %v1014
        %v1016 = vsel %vm1003, %v1013, 0.0
        %1017 = vadd.xlane.f32.xlu0 %v1016
        %v1018 = vpop.xlane.xlu0 %1017
        %v1019 = vsel %vm1003, %v1015, 0.0
        %1020 = vadd.xlane.f32.xlu0 %v1019
        %v1021 = vpop.xlane.xlu0 %1020
        %v1022 = vrcp.pop %v1018
        %v1023 = vrcp.pop %v1021
        %v1024 = vmul.f32 %v1013, %v1022
        %v1025 = vmul.f32 %v1015, %v1023
        %1026 = vst.msk [vmem:[%s481] sm:$0xff] %vm1003, %v1024
        %1027 = vst.msk [vmem:[%s481 + $0x8] sm:$0xff] %vm1003, %v1025
        %v1029 = vsel %vm1003, %v1024, 0
        %1031 = vmatprep.subr.mxu0 0.0
        %1032 = vmatpush1.msra.mxu0 %v848
        %1033 = vmatprep.subr.mxu0 0.0
        %1034 = vmatpush1.msra.mxu0 0.0
        %1035 = vmatprep.subr.mxu0 0.0
        %1036 = vmatpush1.msra.mxu0 0.0
        %1037 = vmatprep.subr.mxu0 0.0
        %1038 = vmatpush1.msra.mxu0 0.0
        %1039 = vmatprep.subr.mxu0 0.0
        %1040 = vmatpush1.msra.mxu0 0.0
        %1041 = vmatprep.subr.mxu0 0.0
        %1042 = vmatpush1.msra.mxu0 0.0
        %1043 = vmatprep.subr.mxu0 0.0
        %1044 = vmatpush1.msra.mxu0 0.0
        %1045 = vmatprep.subr.mxu0 0.0
        %1046 = vmatpush1.msra.mxu0 0.0
        %1047 = vmatprep.subr.mxu0 0.0
        %1048 = vmatpush1.msra.mxu0 0.0
        %1049 = vmatprep.subr.mxu0 0.0
        %1050 = vmatpush1.msra.mxu0 0.0
        %1051 = vmatprep.subr.mxu0 0.0
        %1052 = vmatpush1.msra.mxu0 0.0
        %1053 = vmatprep.subr.mxu0 0.0
        %1054 = vmatpush1.msra.mxu0 0.0
        %1055 = vmatprep.subr.mxu0 0.0
        %1056 = vmatpush1.msra.mxu0 0.0
        %1057 = vmatprep.subr.mxu0 0.0
        %1058 = vmatpush1.msra.mxu0 0.0
        %1059 = vmatprep.subr.mxu0 0.0
        %1060 = vmatpush1.msra.mxu0 0.0
        %1061 = vmatprep.subr.mxu0 0.0
        %1062 = vmatpush1.msra.mxu0 0.0
        %1063 = vmatprep.subr.mxu0 0.0
        %1064 = vmatpush1.msra.mxu0 0.0
        %1065 = vmatprep.subr.mxu0 0.0
        %1066 = vmatpush1.msra.mxu0 0.0
        %1067 = vmatprep.subr.mxu0 0.0
        %1068 = vmatpush1.msra.mxu0 0.0
        %1069 = vmatprep.subr.mxu0 0.0
        %1070 = vmatpush1.msra.mxu0 0.0
        %1071 = vmatprep.subr.mxu0 0.0
        %1072 = vmatpush1.msra.mxu0 0.0
        %1073 = vmatprep.subr.mxu0 0.0
        %1074 = vmatpush1.msra.mxu0 0.0
        %1075 = vmatprep.subr.mxu0 0.0
        %1076 = vmatpush1.msra.mxu0 0.0
        %1077 = vmatprep.subr.mxu0 0.0
        %1078 = vmatpush1.msra.mxu0 0.0
        %1079 = vmatprep.subr.mxu0 0.0
        %1080 = vmatpush1.msra.mxu0 0.0
        %1081 = vmatprep.subr.mxu0 0.0
        %1082 = vmatpush1.msra.mxu0 0.0
        %1083 = vmatprep.subr.mxu0 0.0
        %1084 = vmatpush1.msra.mxu0 0.0
        %1085 = vmatprep.subr.mxu0 0.0
        %1086 = vmatpush1.msra.mxu0 0.0
        %1087 = vmatprep.subr.mxu0 0.0
        %1088 = vmatpush1.msra.mxu0 0.0
        %1089 = vmatprep.subr.mxu0 0.0
        %1090 = vmatpush1.msra.mxu0 0.0
        %1091 = vmatprep.subr.mxu0 0.0
        %1092 = vmatpush1.msra.mxu0 0.0
        %1093 = vmatprep.subr.mxu0 0.0
        %1094 = vmatpush1.msra.mxu0 0.0
        %1095 = vmatprep.mubr.f32.mxu0 0.0
        %1096 = vmatmul.mubr.f32.gmra.mrb[0].mxu0 %v1029
        %v1097 = vpop.f32.mrb[0].mxu0
        %v1098 = vadd.f32 0.0, %v1097
        %v1099 = vpop.f32.mrb[0].mxu0
        %1100 = vdwg.mxu0
        %v1102 = vsel %vm1003, %v1025, 0
        %1104 = vmatprep.subr.mxu0 0.0
        %1105 = vmatpush1.msra.mxu0 %v849
        %1106 = vmatprep.subr.mxu0 0.0
        %1107 = vmatpush1.msra.mxu0 0.0
        %1108 = vmatprep.subr.mxu0 0.0
        %1109 = vmatpush1.msra.mxu0 0.0
        %1110 = vmatprep.subr.mxu0 0.0
        %1111 = vmatpush1.msra.mxu0 0.0
        %1112 = vmatprep.subr.mxu0 0.0
        %1113 = vmatpush1.msra.mxu0 0.0
        %1114 = vmatprep.subr.mxu0 0.0
        %1115 = vmatpush1.msra.mxu0 0.0
        %1116 = vmatprep.subr.mxu0 0.0
        %1117 = vmatpush1.msra.mxu0 0.0
        %1118 = vmatprep.subr.mxu0 0.0
        %1119 = vmatpush1.msra.mxu0 0.0
        %1120 = vmatprep.subr.mxu0 0.0
        %1121 = vmatpush1.msra.mxu0 0.0
        %1122 = vmatprep.subr.mxu0 0.0
        %1123 = vmatpush1.msra.mxu0 0.0
        %1124 = vmatprep.subr.mxu0 0.0
        %1125 = vmatpush1.msra.mxu0 0.0
        %1126 = vmatprep.subr.mxu0 0.0
        %1127 = vmatpush1.msra.mxu0 0.0
        %1128 = vmatprep.subr.mxu0 0.0
        %1129 = vmatpush1.msra.mxu0 0.0
        %1130 = vmatprep.subr.mxu0 0.0
        %1131 = vmatpush1.msra.mxu0 0.0
        %1132 = vmatprep.subr.mxu0 0.0
        %1133 = vmatpush1.msra.mxu0 0.0
        %1134 = vmatprep.subr.mxu0 0.0
        %1135 = vmatpush1.msra.mxu0 0.0
        %1136 = vmatprep.subr.mxu0 0.0
        %1137 = vmatpush1.msra.mxu0 0.0
        %1138 = vmatprep.subr.mxu0 0.0
        %1139 = vmatpush1.msra.mxu0 0.0
        %1140 = vmatprep.subr.mxu0 0.0
        %1141 = vmatpush1.msra.mxu0 0.0
        %1142 = vmatprep.subr.mxu0 0.0
        %1143 = vmatpush1.msra.mxu0 0.0
        %1144 = vmatprep.subr.mxu0 0.0
        %1145 = vmatpush1.msra.mxu0 0.0
        %1146 = vmatprep.subr.mxu0 0.0
        %1147 = vmatpush1.msra.mxu0 0.0
        %1148 = vmatprep.subr.mxu0 0.0
        %1149 = vmatpush1.msra.mxu0 0.0
        %1150 = vmatprep.subr.mxu0 0.0
        %1151 = vmatpush1.msra.mxu0 0.0
        %1152 = vmatprep.subr.mxu0 0.0
        %1153 = vmatpush1.msra.mxu0 0.0
        %1154 = vmatprep.subr.mxu0 0.0
        %1155 = vmatpush1.msra.mxu0 0.0
        %1156 = vmatprep.subr.mxu0 0.0
        %1157 = vmatpush1.msra.mxu0 0.0
        %1158 = vmatprep.subr.mxu0 0.0
        %1159 = vmatpush1.msra.mxu0 0.0
        %1160 = vmatprep.subr.mxu0 0.0
        %1161 = vmatpush1.msra.mxu0 0.0
        %1162 = vmatprep.subr.mxu0 0.0
        %1163 = vmatpush1.msra.mxu0 0.0
        %1164 = vmatprep.subr.mxu0 0.0
        %1165 = vmatpush1.msra.mxu0 0.0
        %1166 = vmatprep.subr.mxu0 0.0
        %1167 = vmatpush1.msra.mxu0 0.0
        %1168 = vmatprep.mubr.f32.mxu0 0.0
        %1169 = vmatmul.mubr.f32.gmra.mrb[0].mxu0 %v1102
        %v1170 = vpop.f32.mrb[0].mxu0
        %v1171 = vadd.f32 0.0, %v1170
        %v1172 = vpop.f32.mrb[0].mxu0
        %1173 = vdwg.mxu0
        %v1174 = vld [vmem:[#allocation17] sm:$0xff]
        %v1175 = vld [vmem:[#allocation17 + $0x8] sm:$0xff]
        %s1176 = scalar_lea.vmem [#allocation16], %s840
        %v1177 = vld [vmem:[%s1176] sm:$0xff]
        %v1178 = vld [vmem:[%s1176 + $0x8] sm:$0xff]
        %v1180 = vsel %vm850, %v1098, 0
        %v1183 = vsel %vm850, %v1171, 0
        %1185 = vmatprep.subr.mxu0 0.0
        %1186 = vmatpush1.msra.mxu0 %v1177
        %1187 = vmatprep.subr.mxu0 0.0
        %1188 = vmatpush1.msra.mxu0 %v1178
        %1189 = vmatprep.subr.mxu0 0.0
        %1190 = vmatpush1.msra.mxu0 0.0
        %1191 = vmatprep.subr.mxu0 0.0
        %1192 = vmatpush1.msra.mxu0 0.0
        %1193 = vmatprep.subr.mxu0 0.0
        %1194 = vmatpush1.msra.mxu0 0.0
        %1195 = vmatprep.subr.mxu0 0.0
        %1196 = vmatpush1.msra.mxu0 0.0
        %1197 = vmatprep.subr.mxu0 0.0
        %1198 = vmatpush1.msra.mxu0 0.0
        %1199 = vmatprep.subr.mxu0 0.0
        %1200 = vmatpush1.msra.mxu0 0.0
        %1201 = vmatprep.subr.mxu0 0.0
        %1202 = vmatpush1.msra.mxu0 0.0
        %1203 = vmatprep.subr.mxu0 0.0
        %1204 = vmatpush1.msra.mxu0 0.0
        %1205 = vmatprep.subr.mxu0 0.0
        %1206 = vmatpush1.msra.mxu0 0.0
        %1207 = vmatprep.subr.mxu0 0.0
        %1208 = vmatpush1.msra.mxu0 0.0
        %1209 = vmatprep.subr.mxu0 0.0
        %1210 = vmatpush1.msra.mxu0 0.0
        %1211 = vmatprep.subr.mxu0 0.0
        %1212 = vmatpush1.msra.mxu0 0.0
        %1213 = vmatprep.subr.mxu0 0.0
        %1214 = vmatpush1.msra.mxu0 0.0
        %1215 = vmatprep.subr.mxu0 0.0
        %1216 = vmatpush1.msra.mxu0 0.0
        %1217 = vmatprep.subr.mxu0 0.0
        %1218 = vmatpush1.msra.mxu0 0.0
        %1219 = vmatprep.subr.mxu0 0.0
        %1220 = vmatpush1.msra.mxu0 0.0
        %1221 = vmatprep.subr.mxu0 0.0
        %1222 = vmatpush1.msra.mxu0 0.0
        %1223 = vmatprep.subr.mxu0 0.0
        %1224 = vmatpush1.msra.mxu0 0.0
        %1225 = vmatprep.subr.mxu0 0.0
        %1226 = vmatpush1.msra.mxu0 0.0
        %1227 = vmatprep.subr.mxu0 0.0
        %1228 = vmatpush1.msra.mxu0 0.0
        %1229 = vmatprep.subr.mxu0 0.0
        %1230 = vmatpush1.msra.mxu0 0.0
        %1231 = vmatprep.subr.mxu0 0.0
        %1232 = vmatpush1.msra.mxu0 0.0
        %1233 = vmatprep.subr.mxu0 0.0
        %1234 = vmatpush1.msra.mxu0 0.0
        %1235 = vmatprep.subr.mxu0 0.0
        %1236 = vmatpush1.msra.mxu0 0.0
        %1237 = vmatprep.subr.mxu0 0.0
        %1238 = vmatpush1.msra.mxu0 0.0
        %1239 = vmatprep.subr.mxu0 0.0
        %1240 = vmatpush1.msra.mxu0 0.0
        %1241 = vmatprep.subr.mxu0 0.0
        %1242 = vmatpush1.msra.mxu0 0.0
        %1243 = vmatprep.subr.mxu0 0.0
        %1244 = vmatpush1.msra.mxu0 0.0
        %1245 = vmatprep.subr.mxu0 0.0
        %1246 = vmatpush1.msra.mxu0 0.0
        %1247 = vmatprep.subr.mxu0 0.0
        %1248 = vmatpush1.msra.mxu0 0.0
        %1249 = vmatprep.mubr.f32.mxu0 0.0
        %1250 = vmatmul.mubr.f32.gmra.mrb[0].mxu0 %v1180
        %v1251 = vpop.f32.mrb[0].mxu0
        %v1252 = vadd.f32 0.0, %v1251
        %v1253 = vpop.f32.mrb[0].mxu0
        %1254 = vmatprep.mubr.f32.mxu0 0.0
        %1255 = vmatmul.mubr.f32.gmra.mrb[0].mxu0 %v1183
        %v1256 = vpop.f32.mrb[0].mxu0
        %v1257 = vadd.f32 0.0, %v1256
        %v1258 = vpop.f32.mrb[0].mxu0
        %1259 = vdwg.mxu0
        %v1260 = vadd.f32 %v1174, %v1252
        %v1261 = vadd.f32 %v1175, %v1257
        %vm1262 = vcmask 261120
        %1263 = vst.msk [vmem:[#allocation17] sm:$0xff] %vm1262, %v1260
        %1264 = vst.msk [vmem:[#allocation17 + $0x8] sm:$0xff] %vm1262, %v1261
        %s1265 = sand.u32 %s282, 1
        %s1266 = scalar_lea.sflag [#allocation19], %s1265
        %s1267 = sand.u32 %s282, 1
        %s1268 = smul.addr %s1267, 16
        %s1269 = scalar_lea.vmem [#allocation18], %s1268
        // Predicated region
        $region89: #{tpu_custom_call.1} parent=55 // pred_check
          %p1270 = pneg %p264
        $region90: #{tpu_custom_call.1} parent=55 // pred_check_branch
          %1272 = sbr.rel (%p1270) target = $region92
        $region91: #{tpu_custom_call.1} parent=55 // pred_region
          %s1273 = smul.u32 2, %s34
          %s1275 = ssub.s32 256, 256
          %1276 = vsyncadd [#allocation7], %s1275
          %s1277 = smul.addr %s1273, 128
          %s1278 = scalar_lea.hbm %s9, %s1277
          %s1279 = sshll.u32 [#allocation17], 4
          %s1280 = int_to_ptr.vmem [resolvable:$true] %s1279
          %1285 = dma.vmem_to_hbm [thread:$0]  %s1280, 256, %s1278, [#allocation7], 128, 128, 8
        $region92: #{tpu_custom_call.1} parent=55 // pred_fallthru
          _
        // Predicated region
        $region93: #{tpu_custom_call.1} parent=55 // pred_check
          %p1286 = pneg %p292
        $region94: #{tpu_custom_call.1} parent=55 // pred_check_branch
          %1288 = sbr.rel (%p1286) target = $region96
        $region95: #{tpu_custom_call.1} parent=55 // pred_region
          %s1289 = smul.u32 2, %s34
          %s1291 = ssub.s32 256, 256
          %1292 = vsyncadd %s1266, %s1291
          %s1293 = smul.addr %s1289, 2
          %s1294 = sadd.s32 %s35, %s1293
          %s1295 = smul.addr %s1294, 128
          %s1296 = scalar_lea.hbm %s10, %s1295
          %s1297 = sshll.u32 %s1269, 4
          %s1298 = int_to_ptr.vmem [resolvable:$true] %s1297
          %1303 = dma.vmem_to_hbm [thread:$0]  %s1298, 256, %s1296, %s1266, 128, 256, 8
        $region96: #{tpu_custom_call.1} parent=55 // pred_fallthru
          _
        // Predicated region
        $region97: #{tpu_custom_call.1} parent=55 // pred_check
          %p1304 = pneg %p264
        $region98: #{tpu_custom_call.1} parent=55 // pred_check_branch
          %1306 = sbr.rel (%p1304) target = $region100
        $region99: #{tpu_custom_call.1} parent=55 // pred_region
          %1307 = dma.done [#allocation7], 256
        $region100: #{tpu_custom_call.1} parent=55 // pred_fallthru
          _
      $region56: #{tpu_custom_call.1} parent=5 // pred_fallthru
        _
      %p1308 = scmp.le.s32.totalorder 2, %s25
      // Predicated region
      $region101: #{tpu_custom_call.1} parent=5 // pred_check
        %p1309 = pneg %p1308
      $region102: #{tpu_custom_call.1} parent=5 // pred_check_branch
        %1311 = sbr.rel (%p1309) target = $region104
      $region103: #{tpu_custom_call.1} parent=5 // pred_region
        %s1312 = ssub.s32 %s25, 2
        // Predicated region
        $region105: #{tpu_custom_call.1} parent=103 // pred_check
          %p1313 = pneg %p298
        $region106: #{tpu_custom_call.1} parent=103 // pred_check_branch
          %1315 = sbr.rel (%p1313) target = $region108
        $region107: #{tpu_custom_call.1} parent=103 // pred_region
          %s1316 = sand.u32 %s283, 1
          %s1317 = scalar_lea.sflag [#allocation19], %s1316
          %s1318 = sand.u32 %s283, 1
          %s1319 = smul.addr %s1318, 16
          %s1320 = scalar_lea.vmem [#allocation18], %s1319
          %1321 = dma.done %s1317, 256
        $region108: #{tpu_custom_call.1} parent=103 // pred_fallthru
          _
      $region104: #{tpu_custom_call.1} parent=5 // pred_fallthru
        _
    $region6: #{tpu_custom_call.1} parent=1 // loop_footer
      %s29 = sadd.s32 1, %s25
    $region7: #{tpu_custom_call.1} parent=1 // loop_footer_branch
      %24 = sbr.rel target = $region3
    $region8: #{tpu_custom_call.1} parent=1 // loop_exit
      _
    %1322 = vsyncpa [#allocation6], 1
    %s1323 = scalar_lea.sflag [#allocation6], 1
    %1324 = vsyncpa %s1323, 1
    %1325 = vsyncpa [#allocation9], 1
    %1326 = vsyncpa [#allocation12], 1
    %1327 = vsyncpa [#allocation15], 1
    %1328 = vsyncpa [#allocation7], 1
    %s1329 = scalar_lea.sflag [#allocation7], 1
    %1330 = vsyncpa %s1329, 1
    %1331 = vsyncpa [#allocation19], 1
    %s1332 = scalar_lea.sflag [#allocation19], 1
    %1333 = vsyncpa %s1332, 1

</llo_original>
